<compile_context>
chip_gen: v7x
topology: tpu7x:2x2x1
jax: 0.10.0
libtpu: 0.0.40
codegen_flags: <defaults>
</compile_context>

<pallas_src>
import functools

import jax
import jax.numpy as jnp
from jax.experimental import pallas as pl
from jax.experimental.pallas import tpu as pltpu


# ----------------------------------------------------------------------------
# Model configuration (synthetic, deterministic)
# ----------------------------------------------------------------------------
NUM_DOMAINS = 3

# sparse features: (name, vocab_size, embed_dim)
WIDE_FEATURES = [("w_feat0", 11, 8), ("w_feat1", 7, 8)]
DEEP_FEATURES = [("d_feat0", 13, 16), ("d_feat1", 9, 16)]
ALL_FEATURES = WIDE_FEATURES + DEEP_FEATURES

WIDE_DIMS = sum(d for _, _, d in WIDE_FEATURES)   # 16
DEEP_DIMS = sum(d for _, _, d in DEEP_FEATURES)   # 32
MLP_DIMS = [64, 32]                               # hidden dims; output layer -> 1
H1, H2 = MLP_DIMS

VOCAB_OFFSETS = {}
_off = 0
for _name, _vocab, _dim in ALL_FEATURES:
    VOCAB_OFFSETS[_name] = _off
    _off += _vocab
V_TOTAL = _off                                    # 40

BATCH = 2048        # example batch
BLOCK_B = 1024      # batch rows per grid step (lane axis). Sweep 1024-8192 per
                    # chip; keep >=2 grid steps on v7x, 1 step on v5e/v6e for
                    # small batches.


# ----------------------------------------------------------------------------
# Pallas kernel: fused multi-hot lookup + (folded) LR + MLP + sigmoid + mask
# All activations are feature-major: (feature_dim, batch) with batch in lanes.
# ----------------------------------------------------------------------------
def widedeep_md_kernel(num_domains,
                       idx_ref,     # (5, Bt) int32  VMEM  rows 0..3 = GLOBAL vocab ids, row 4 = domain
                       ct_ref,      # (H1+1, V_TOTAL) bf16  combined folded table (transposed)
                       b1_ref,      # (H1, 1) f32
                       w2t_ref,     # (H2, H1) bf16
                       b2_ref,      # (H2, 1) f32
                       w3t_ref,     # (1, H2) bf16
                       bout_ref,    # (1, 1) f32  SMEM  (= b_lr + b3)
                       out_ref):    # (8, Bt) f32  (row 0 carries the result)
    idx = idx_ref[...]                           # (5, Bt)
    bt = idx.shape[1]
    n_feat = idx.shape[0] - 1                    # 4 sparse features
    h1 = ct_ref.shape[0] - 1                     # 64
    v_total = ct_ref.shape[1]                    # 40

    # Multi-hot (V_TOTAL, Bt): single sublane iota, one compare per feature, OR.
    viota = jax.lax.broadcasted_iota(jnp.int32, (v_total, bt), 0)
    hit = viota == idx[0:1, :]
    for c in range(1, n_feat):
        hit = jnp.logical_or(hit, viota == idx[c:c + 1, :])
    multihot = hit.astype(jnp.bfloat16)          # (V_TOTAL, Bt), exact 0/1

    # ONE MXU push: embedding gather + concat + first MLP layer + LR head.
    #   rows 0..h1-1 : deep branch pre-activations (W1 pre-folded into the table)
    #   row  h1      : wide LR logit contribution (w_lr pre-folded into the table)
    z = jnp.dot(ct_ref[...], multihot, preferred_element_type=jnp.float32)   # (h1+1, Bt)
    h = jnp.maximum(z[0:h1, :] + b1_ref[...], 0.0)                           # (64, Bt)
    wide_logit = z[h1:h1 + 1, :]                                             # (1, Bt)

    # Second MLP layer (transposed) -> ReLU.
    h2 = jnp.dot(w2t_ref[...], h.astype(jnp.bfloat16),
                 preferred_element_type=jnp.float32) + b2_ref[...]           # (32, Bt)
    h2 = jnp.maximum(h2, 0.0)

    # Output layer of the MLP; fused scalar bias = b_lr + b3.
    y = jnp.dot(w3t_ref[...], h2.astype(jnp.bfloat16),
                preferred_element_type=jnp.float32)                          # (1, Bt)
    y = jax.nn.sigmoid(y + wide_logit + bout_ref[0, 0])

    # All domains share the same LR/MLP modules, so the per-domain where-combine
    # collapses to one in-range mask on the domain indicator.
    did = idx[n_feat:n_feat + 1, :]
    valid = jnp.logical_and(did >= 0, did < num_domains)
    y = jnp.where(valid, y, 0.0)                                             # (1, Bt)

    # Lane-dense, unmasked stores (8 sublanes x block_b lanes); row 0 is the result.
    out_ref[...] = jnp.broadcast_to(y, out_ref.shape)


# ----------------------------------------------------------------------------
# Wrapper: grid over batch (lanes), weights resident, output sliced to (B,)
# ----------------------------------------------------------------------------
def _round_up(x, m):
    return ((x + m - 1) // m) * m


def prepare_kernel_params(params):
    """Build the folded block-diagonal table and transposed bf16 MXU operands."""
    hp = jax.lax.Precision.HIGHEST
    emb, w1, w_lr = params["emb"], params["w1"], params["w_lr"]

    # Combined table C: (V_TOTAL, H1+1).
    #   deep rows, cols 0..H1-1 : T_deep @ W1-slice   (first MLP layer pre-folded)
    #   wide rows, col  H1      : T_wide @ w_lr-slice (LR head pre-folded)
    comb = jnp.zeros((V_TOTAL, H1 + 1), jnp.float32)
    col = 0
    for name, vocab, dim in DEEP_FEATURES:
        off = VOCAB_OFFSETS[name]
        folded = jnp.dot(emb[name], w1[col:col + dim, :], precision=hp)      # (vocab, H1)
        comb = comb.at[off:off + vocab, 0:H1].set(folded)
        col += dim
    col = 0
    for name, vocab, dim in WIDE_FEATURES:
        off = VOCAB_OFFSETS[name]
        folded = jnp.dot(emb[name], w_lr[col:col + dim, :], precision=hp)    # (vocab, 1)
        comb = comb.at[off:off + vocab, H1:H1 + 1].set(folded)
        col += dim

    return {
        "ct":    comb.T.astype(jnp.bfloat16),                       # (H1+1, V_TOTAL)
        "b1t":   params["b1"].reshape(H1, 1).astype(jnp.float32),   # (H1, 1)
        "w2t":   params["w2"].T.astype(jnp.bfloat16),               # (H2, H1)
        "b2t":   params["b2"].reshape(H2, 1).astype(jnp.float32),   # (H2, 1)
        "w3t":   params["w3"].T.astype(jnp.bfloat16),               # (1, H2)
        "b_out": (params["b_lr"] + params["b3"]).reshape(1, 1).astype(jnp.float32),
    }


def pack_indices(x_dict):
    """(5, B) int32: rows 0..3 = per-feature GLOBAL vocab ids, row 4 = domain id."""
    rows = [x_dict[name].astype(jnp.int32) + VOCAB_OFFSETS[name]
            for name, _, _ in ALL_FEATURES]
    rows.append(x_dict["domain_indicator"].astype(jnp.int32))
    return jnp.stack(rows, axis=0)


def widedeep_md_forward(idx_t, params_k, *, block_b=BLOCK_B):
    """idx_t: (5, B) int32 packed indices (see pack_indices)."""
    B = idx_t.shape[1]
    block_b = max(128, min(block_b, _round_up(B, 128)))
    block_b = _round_up(block_b, 128)            # lane-dim blocks: multiple of 128
    b_pad = _round_up(B, block_b)
    if b_pad != B:
        # Pad with -1: no vocab hit and invalid domain -> masked to 0, sliced off.
        idx_t = jnp.pad(idx_t, ((0, 0), (0, b_pad - B)), constant_values=-1)
    grid = (b_pad // block_b,)

    def resident(arr):
        # Full-array block, same block index every step -> stays VMEM-resident.
        return pl.BlockSpec(arr.shape, lambda i: (0, 0))

    in_specs = [
        pl.BlockSpec((idx_t.shape[0], block_b), lambda i: (0, i)),   # indices tile
        resident(params_k["ct"]),
        resident(params_k["b1t"]),
        resident(params_k["w2t"]),
        resident(params_k["b2t"]),
        resident(params_k["w3t"]),
        pl.BlockSpec(memory_space=pltpu.MemorySpace.SMEM),           # fused scalar bias
    ]

    out = pl.pallas_call(
        functools.partial(widedeep_md_kernel, NUM_DOMAINS),
        out_shape=jax.ShapeDtypeStruct((8, b_pad), jnp.float32),
        grid=grid,
        in_specs=in_specs,
        out_specs=pl.BlockSpec((8, block_b), lambda i: (0, i)),
        compiler_params=pltpu.CompilerParams(
            dimension_semantics=("parallel",)),
    )(idx_t, params_k["ct"], params_k["b1t"], params_k["w2t"],
      params_k["b2t"], params_k["w3t"], params_k["b_out"])

    return out[0, :B]          # matches `final.squeeze(1)` in the PyTorch forward


def model_forward(x_dict, params, *, block_b=BLOCK_B):
    params_k = prepare_kernel_params(params)
    return widedeep_md_forward(pack_indices(x_dict), params_k, block_b=block_b)


# ----------------------------------------------------------------------------
# Deterministic parameter init (original, un-folded parameterization)
# ----------------------------------------------------------------------------
def init_params(key):
    ks = list(jax.random.split(key, 16))
    p = {"emb": {}}
    for i, (name, vocab, dim) in enumerate(ALL_FEATURES):
        p["emb"][name] = 0.1 * jax.random.normal(ks[i], (vocab, dim), jnp.float32)
    # LR: Linear(wide_dims, 1)
    p["w_lr"] = 0.1 * jax.random.normal(ks[8], (WIDE_DIMS, 1), jnp.float32)
    p["b_lr"] = jnp.zeros((1, 1), jnp.float32)
    # MLP: deep_dims -> 64 -> 32 -> 1
    # TODO(synk): BatchNorm1d / Dropout of the torch_rechub MLP are omitted —
    # identity at eval time with freshly-initialized running stats.
    p["w1"] = 0.1 * jax.random.normal(ks[9], (DEEP_DIMS, H1), jnp.float32)
    p["b1"] = jnp.zeros((1, H1), jnp.float32)
    p["w2"] = 0.1 * jax.random.normal(ks[10], (H1, H2), jnp.float32)
    p["b2"] = jnp.zeros((1, H2), jnp.float32)
    p["w3"] = 0.1 * jax.random.normal(ks[11], (H2, 1), jnp.float32)
    p["b3"] = jnp.zeros((1, 1), jnp.float32)
    return p


# ----------------------------------------------------------------------------
# Pure-f32 reference with the ORIGINAL module structure (un-folded, per-domain
# loop as in the PyTorch forward). Tolerance covers the kernel's bf16 MXU
# operands (f32 accumulation).
# ----------------------------------------------------------------------------
def reference_forward(x_dict, params):
    hp = jax.lax.Precision.HIGHEST
    emb = params["emb"]
    wide = jnp.concatenate(
        [jnp.take(emb[n], x_dict[n].astype(jnp.int32), axis=0) for n, _, _ in WIDE_FEATURES],
        axis=-1)
    deep = jnp.concatenate(
        [jnp.take(emb[n], x_dict[n].astype(jnp.int32), axis=0) for n, _, _ in DEEP_FEATURES],
        axis=-1)

    lr = jnp.dot(wide, params["w_lr"], precision=hp) + params["b_lr"]          # (B, 1)
    h = jnp.maximum(jnp.dot(deep, params["w1"], precision=hp) + params["b1"], 0.0)
    h = jnp.maximum(jnp.dot(h, params["w2"], precision=hp) + params["b2"], 0.0)
    mlp = jnp.dot(h, params["w3"], precision=hp) + params["b3"]                # (B, 1)
    y = jax.nn.sigmoid(lr + mlp)                                               # same for every domain

    dom = x_dict["domain_indicator"].astype(jnp.int32)
    final = jnp.zeros_like(y)
    for d in range(NUM_DOMAINS):
        final = jnp.where((dom == d)[:, None], y, final)
    return final[:, 0]


if __name__ == "__main__":
    key = jax.random.PRNGKey(0)
    k_param, k0, k1, k2, k3, kd = jax.random.split(key, 6)
    params = init_params(k_param)

    B = BATCH
    x = {
        "w_feat0": jax.random.randint(k0, (B,), 0, WIDE_FEATURES[0][1]),
        "w_feat1": jax.random.randint(k1, (B,), 0, WIDE_FEATURES[1][1]),
        "d_feat0": jax.random.randint(k2, (B,), 0, DEEP_FEATURES[0][1]),
        "d_feat1": jax.random.randint(k3, (B,), 0, DEEP_FEATURES[1][1]),
        "domain_indicator": jax.random.randint(kd, (B,), 0, NUM_DOMAINS),
    }

    out = model_forward(x, params)
    jax.block_until_ready(out)

    ref = reference_forward(x, params)
    assert out.shape == (B,)
    assert jnp.allclose(out, ref, atol=2e-3, rtol=2e-3)

    print("KERNEL_OK")
</pallas_src>

<mosaic_0001>
module attributes {stable_mosaic.version = 11 : i64} {
  func.func @widedeep_md_kernel(%arg0: i32, %arg1: memref<5x1024xi32, #tpu.memory_space<vmem>>, %arg2: memref<65x40xbf16, #tpu.memory_space<vmem>>, %arg3: memref<64x1xf32, #tpu.memory_space<vmem>>, %arg4: memref<32x64xbf16, #tpu.memory_space<vmem>>, %arg5: memref<32x1xf32, #tpu.memory_space<vmem>>, %arg6: memref<1x32xbf16, #tpu.memory_space<vmem>>, %arg7: memref<1x1xf32, #tpu.memory_space<smem>>, %arg8: memref<8x1024xf32, #tpu.memory_space<vmem>>) attributes {dimension_semantics = [#tpu.dimension_semantics<parallel>], iteration_bounds = array<i64: 2>, scalar_prefetch = 0 : i64, scratch_operands = 0 : i64, tpu.core_type = #tpu.core_type<tc>, window_params = [{transform_indices = @transform_0, window_bounds = array<i64: 5, 1024>}, {pipeline_mode = #tpu.pipeline_mode<synchronous>, transform_indices = @transform_1, window_bounds = array<i64: 65, 40>}, {pipeline_mode = #tpu.pipeline_mode<synchronous>, transform_indices = @transform_2, window_bounds = array<i64: 64, 1>}, {pipeline_mode = #tpu.pipeline_mode<synchronous>, transform_indices = @transform_3, window_bounds = array<i64: 32, 64>}, {pipeline_mode = #tpu.pipeline_mode<synchronous>, transform_indices = @transform_4, window_bounds = array<i64: 32, 1>}, {pipeline_mode = #tpu.pipeline_mode<synchronous>, transform_indices = @transform_5, window_bounds = array<i64: 1, 32>}, {transform_indices = @transform_6, window_bounds = array<i64: 1, 1>}, {transform_indices = @transform_7, window_bounds = array<i64: 8, 1024>}]} {
    %c0 = arith.constant 0 : index
    %c0_0 = arith.constant 0 : index
    %0 = vector.load %arg1[%c0, %c0_0] : memref<5x1024xi32, #tpu.memory_space<vmem>>, vector<5x1024xi32>
    %1 = tpu.iota {dimensions = array<i32: 0>} : vector<40x1024xi32>
    %2 = vector.extract_strided_slice %0 {offsets = [0, 0], sizes = [1, 1024], strides = [1, 1]} : vector<5x1024xi32> to vector<1x1024xi32>
    %3 = vector.broadcast %2 : vector<1x1024xi32> to vector<40x1024xi32>
    %4 = arith.cmpi eq, %1, %3 : vector<40x1024xi32>
    %5 = vector.extract_strided_slice %0 {offsets = [1, 0], sizes = [1, 1024], strides = [1, 1]} : vector<5x1024xi32> to vector<1x1024xi32>
    %6 = vector.broadcast %5 : vector<1x1024xi32> to vector<40x1024xi32>
    %7 = arith.cmpi eq, %1, %6 : vector<40x1024xi32>
    %8 = arith.ori %4, %7 : vector<40x1024xi1>
    %9 = vector.extract_strided_slice %0 {offsets = [2, 0], sizes = [1, 1024], strides = [1, 1]} : vector<5x1024xi32> to vector<1x1024xi32>
    %10 = vector.broadcast %9 : vector<1x1024xi32> to vector<40x1024xi32>
    %11 = arith.cmpi eq, %1, %10 : vector<40x1024xi32>
    %12 = arith.ori %8, %11 : vector<40x1024xi1>
    %13 = vector.extract_strided_slice %0 {offsets = [3, 0], sizes = [1, 1024], strides = [1, 1]} : vector<5x1024xi32> to vector<1x1024xi32>
    %14 = vector.broadcast %13 : vector<1x1024xi32> to vector<40x1024xi32>
    %15 = arith.cmpi eq, %1, %14 : vector<40x1024xi32>
    %16 = arith.ori %12, %15 : vector<40x1024xi1>
    %17 = arith.extui %16 : vector<40x1024xi1> to vector<40x1024xi32>
    %18 = arith.sitofp %17 : vector<40x1024xi32> to vector<40x1024xf32>
    %19 = arith.truncf %18 : vector<40x1024xf32> to vector<40x1024xbf16>
    %c0_1 = arith.constant 0 : index
    %c0_2 = arith.constant 0 : index
    %20 = vector.load %arg2[%c0_1, %c0_2] : memref<65x40xbf16, #tpu.memory_space<vmem>>, vector<65x40xbf16>
    %cst = arith.constant dense<0.000000e+00> : vector<65x1024xf32>
    %21 = tpu.matmul %20, %19, %cst {dimension_numbers = #tpu.dot_dimension_numbers<[1], [0], [0], [1], [0, 0, 1, 1], [], []>} : vector<65x40xbf16>, vector<40x1024xbf16>, vector<65x1024xf32> -> vector<65x1024xf32>
    %22 = vector.extract_strided_slice %21 {offsets = [0, 0], sizes = [64, 1024], strides = [1, 1]} : vector<65x1024xf32> to vector<64x1024xf32>
    %c0_3 = arith.constant 0 : index
    %c0_4 = arith.constant 0 : index
    %23 = vector.load %arg3[%c0_3, %c0_4] : memref<64x1xf32, #tpu.memory_space<vmem>>, vector<64x1xf32>
    %24 = vector.broadcast %23 : vector<64x1xf32> to vector<64x1024xf32>
    %25 = arith.addf %22, %24 : vector<64x1024xf32>
    %cst_5 = arith.constant 0.000000e+00 : f32
    %26 = vector.broadcast %cst_5 : f32 to vector<64x1024xf32>
    %27 = arith.maximumf %25, %26 : vector<64x1024xf32>
    %28 = vector.extract_strided_slice %21 {offsets = [64, 0], sizes = [1, 1024], strides = [1, 1]} : vector<65x1024xf32> to vector<1x1024xf32>
    %c0_6 = arith.constant 0 : index
    %c0_7 = arith.constant 0 : index
    %29 = vector.load %arg4[%c0_6, %c0_7] : memref<32x64xbf16, #tpu.memory_space<vmem>>, vector<32x64xbf16>
    %30 = arith.truncf %27 : vector<64x1024xf32> to vector<64x1024xbf16>
    %cst_8 = arith.constant dense<0.000000e+00> : vector<32x1024xf32>
    %31 = tpu.matmul %29, %30, %cst_8 {dimension_numbers = #tpu.dot_dimension_numbers<[1], [0], [0], [1], [0, 0, 1, 1], [], []>} : vector<32x64xbf16>, vector<64x1024xbf16>, vector<32x1024xf32> -> vector<32x1024xf32>
    %c0_9 = arith.constant 0 : index
    %c0_10 = arith.constant 0 : index
    %32 = vector.load %arg5[%c0_9, %c0_10] : memref<32x1xf32, #tpu.memory_space<vmem>>, vector<32x1xf32>
    %33 = vector.broadcast %32 : vector<32x1xf32> to vector<32x1024xf32>
    %34 = arith.addf %31, %33 : vector<32x1024xf32>
    %cst_11 = arith.constant 0.000000e+00 : f32
    %35 = vector.broadcast %cst_11 : f32 to vector<32x1024xf32>
    %36 = arith.maximumf %34, %35 : vector<32x1024xf32>
    %c0_12 = arith.constant 0 : index
    %c0_13 = arith.constant 0 : index
    %37 = vector.load %arg6[%c0_12, %c0_13] : memref<1x32xbf16, #tpu.memory_space<vmem>>, vector<1x32xbf16>
    %38 = arith.truncf %36 : vector<32x1024xf32> to vector<32x1024xbf16>
    %cst_14 = arith.constant dense<0.000000e+00> : vector<1x1024xf32>
    %39 = tpu.matmul %37, %38, %cst_14 {dimension_numbers = #tpu.dot_dimension_numbers<[1], [0], [0], [1], [0, 0, 1, 1], [], []>} : vector<1x32xbf16>, vector<32x1024xbf16>, vector<1x1024xf32> -> vector<1x1024xf32>
    %40 = arith.addf %39, %28 : vector<1x1024xf32>
    %c0_15 = arith.constant 0 : index
    %c0_16 = arith.constant 0 : index
    %41 = memref.load %arg7[%c0_15, %c0_16] : memref<1x1xf32, #tpu.memory_space<smem>>
    %42 = vector.broadcast %41 : f32 to vector<1x1024xf32>
    %43 = arith.addf %40, %42 : vector<1x1024xf32>
    %44 = arith.negf %43 : vector<1x1024xf32>
    %45 = math.exp %44 : vector<1x1024xf32>
    %cst_17 = arith.constant 1.000000e+00 : f32
    %46 = vector.broadcast %cst_17 : f32 to vector<1x1024xf32>
    %47 = arith.addf %46, %45 : vector<1x1024xf32>
    %48 = arith.divf %46, %47 : vector<1x1024xf32>
    %49 = vector.extract_strided_slice %0 {offsets = [4, 0], sizes = [1, 1024], strides = [1, 1]} : vector<5x1024xi32> to vector<1x1024xi32>
    %c0_i32 = arith.constant 0 : i32
    %50 = vector.broadcast %c0_i32 : i32 to vector<1x1024xi32>
    %51 = arith.cmpi sge, %49, %50 : vector<1x1024xi32>
    %c3_i32 = arith.constant 3 : i32
    %52 = vector.broadcast %c3_i32 : i32 to vector<1x1024xi32>
    %53 = arith.cmpi slt, %49, %52 : vector<1x1024xi32>
    %54 = arith.andi %51, %53 : vector<1x1024xi1>
    %cst_18 = arith.constant 0.000000e+00 : f32
    %55 = vector.broadcast %cst_18 : f32 to vector<1x1024xf32>
    %56 = arith.select %54, %48, %55 : vector<1x1024xi1>, vector<1x1024xf32>
    %57 = vector.shape_cast %56 : vector<1x1024xf32> to vector<1x1024xf32>
    %58 = vector.broadcast %57 : vector<1x1024xf32> to vector<8x1024xf32>
    %c0_19 = arith.constant 0 : index
    %c0_20 = arith.constant 0 : index
    %59 = vector.load %arg8[%c0_19, %c0_20] : memref<8x1024xf32, #tpu.memory_space<vmem>>, vector<8x1024xf32>
    tpu.vector_store %arg8[%c0_19, %c0_20], %58 {strides = array<i32>} : memref<8x1024xf32, #tpu.memory_space<vmem>>, vector<8x1024xf32>,
    return
  }
  func.func @transform_0(%arg0: i32) -> (i32, i32) {
    %c0_i32 = arith.constant 0 : i32
    %c0_i32_0 = arith.constant 0 : i32
    return %c0_i32, %arg0 : i32, i32
  }
  func.func @transform_1(%arg0: i32) -> (i32, i32) {
    %c0_i32 = arith.constant 0 : i32
    %c0_i32_0 = arith.constant 0 : i32
    %c0_i32_1 = arith.constant 0 : i32
    return %c0_i32, %c0_i32_0 : i32, i32
  }
  func.func @transform_2(%arg0: i32) -> (i32, i32) {
    %c0_i32 = arith.constant 0 : i32
    %c0_i32_0 = arith.constant 0 : i32
    %c0_i32_1 = arith.constant 0 : i32
    return %c0_i32, %c0_i32_0 : i32, i32
  }
  func.func @transform_3(%arg0: i32) -> (i32, i32) {
    %c0_i32 = arith.constant 0 : i32
    %c0_i32_0 = arith.constant 0 : i32
    %c0_i32_1 = arith.constant 0 : i32
    return %c0_i32, %c0_i32_0 : i32, i32
  }
  func.func @transform_4(%arg0: i32) -> (i32, i32) {
    %c0_i32 = arith.constant 0 : i32
    %c0_i32_0 = arith.constant 0 : i32
    %c0_i32_1 = arith.constant 0 : i32
    return %c0_i32, %c0_i32_0 : i32, i32
  }
  func.func @transform_5(%arg0: i32) -> (i32, i32) {
    %c0_i32 = arith.constant 0 : i32
    %c0_i32_0 = arith.constant 0 : i32
    %c0_i32_1 = arith.constant 0 : i32
    return %c0_i32, %c0_i32_0 : i32, i32
  }
  func.func @transform_6(%arg0: i32) -> (i32, i32) {
    %c0_i32 = arith.constant 0 : i32
    %c0_i32_0 = arith.constant 0 : i32
    %c0_i32_1 = arith.constant 0 : i32
    return %c0_i32, %c0_i32_0 : i32, i32
  }
  func.func @transform_7(%arg0: i32) -> (i32, i32) {
    %c0_i32 = arith.constant 0 : i32
    %c0_i32_0 = arith.constant 0 : i32
    return %c0_i32, %arg0 : i32, i32
  }
}

</mosaic_0001>

<llo_original>
// kernel: tpu_custom_call.1
$region0: #{tpu_custom_call.1}
  #allocation0 [shape = 'u32[]', space=smem, size = 0x4, offset = 0x4, fixed_abs, tag = 'smem constant byte address 0x4 - core index']
  #allocation1 [shape = 'u32[144,128]{1,0:T(1,128)}', space=vmem, size = 0x12000, scoped, tag = 'internal scratch']
  #allocation2 [shape = 'f32[1,1]{1,0:T(1,128)S(6)}', space=smem, size = 0x200, scoped, tag = 'scoped memory for tpu_custom_call.1']
  %s0 = inlined_call_operand.vmem [shape: s32[5,2048], index: 0, kind: input, shape index: {}]
  %s1 = inlined_call_operand.vmem [shape: bf16[65,40], index: 1, kind: input, shape index: {}]
  %s2 = inlined_call_operand.vmem [shape: f32[64,1], index: 2, kind: input, shape index: {}]
  %s3 = inlined_call_operand.vmem [shape: bf16[32,64], index: 3, kind: input, shape index: {}]
  %s4 = inlined_call_operand.vmem [shape: f32[32,1], index: 4, kind: input, shape index: {}]
  %s5 = inlined_call_operand.vmem [shape: bf16[1,32], index: 5, kind: input, shape index: {}]
  %s6 = inlined_call_operand.<no memory space> [shape: f32[1,1], index: 6, kind: input, shape index: {}]
  %s7 = inlined_call_operand.hbm [shape: f32[8,2048], index: 7, kind: output, shape index: {}]
  %s8 = sld [smem:[#allocation0]]
  $region61: #{tpu_custom_call.1} parent=0
    _
  %s10 = ssub.s32 1, %s8
  %s11 = scalar_select 0, %s10, %s8
  %12 = sst [smem:[#allocation2]] %s6
  $region1: #{tpu_custom_call.1} parent=0
    #allocation3 [shape = 'u8[65536]{0}', space=vmem, size = 0x10000, scoped, tag = 'output window, operand 0']
    #allocation4 [shape = 's32[2]{0}', space=sflag, size = 0x8, scoped, tag = 'scoped memory for tpu_custom_call.1']
    %13 = vsyncpa [#allocation4], 0
    %s14 = scalar_lea.sflag [#allocation4], 1
    %15 = vsyncpa %s14, 0
    loop: start=0, step=1, limit=4
    $region2: #{tpu_custom_call.1} parent=1 // loop_pre_header
      _
    $region3: #{tpu_custom_call.1} parent=1 // loop_header
      %s17 = sphi 0, %s21
      %p18 = scmp.ge.s32.totalorder %s17, 4
      %s27 = sphi 0, %s29
      %s30 = sphi 0, %s27
      %s31 = sphi 0, %s30
      %s47 = sphi 0, %s31
      %s51 = sphi 0, %s51
      %s53 = sphi 0, %s51
      %s54 = sphi 0, %s53
      %s68 = sphi 0, %s54
      %s72 = sphi 0, %s72
      %s74 = sphi 0, %s72
      %s75 = sphi 0, %s74
      %s89 = sphi 0, %s75
      %s93 = sphi 0, %s93
      %s95 = sphi 0, %s93
      %s96 = sphi 0, %s95
      %s110 = sphi 0, %s96
      %s114 = sphi 0, %s114
      %s116 = sphi 0, %s114
      %s117 = sphi 0, %s116
      %s131 = sphi 0, %s117
      %s135 = sphi 0, %s135
      %s137 = sphi 0, %s135
      %s138 = sphi 0, %s137
      %s152 = sphi 0, %s138
      %s156 = sphi 0, %s156
      %s158 = sphi 0, %s156
      %s159 = sphi 0, %s158
      %s173 = sphi 0, %s159
      %s179 = sphi 0, %s181
      %s182 = sphi 0, %s179
      %s183 = sphi 0, %s182
      %s199 = sphi 0, %s183
    $region4: #{tpu_custom_call.1} parent=1 // loop_header_branch
      %20 = sbr.rel (%p18) target = $region8
    $region5: #{tpu_custom_call.1} parent=1 // loop_body
      %s22 = ssub.s32 %s17, 1
      %s23 = ssub.s32 %s17, 2
      %s24 = sadd.s32 %s17, 1
      %s25 = ssub.s32 %s17, %s24
      %p26 = scmp.eq.s32.totalorder %s25, 0
      %s28 = sadd.s32 %s27, 1
      %s29 = scalar_select %p26, %s27, %s28
      %p32 = pneg %p26
      %p33 = scmp.eq.s32.totalorder %s17, 1
      %p34 = por %p32, %p33
      %p35 = scmp.ne.s32.totalorder %s27, %s30
      %p36 = scmp.eq.s32.totalorder %s17, 0
      %p37 = por %p35, %p36
      %p38 = scmp.ne.s32.totalorder %s27, %s30
      %p39 = scmp.eq.s32.totalorder %s22, 1
      %p40 = por %p38, %p39
      %p41 = scmp.ne.s32.totalorder %s30, %s31
      %p42 = scmp.eq.s32.totalorder %s22, 0
      %p43 = por %p41, %p42
      %p44 = scmp.ne.s32.totalorder %s30, %s31
      %p45 = scmp.eq.s32.totalorder %s23, 1
      %p46 = por %p44, %p45
      %p48 = scmp.ne.s32.totalorder %s31, %s47
      %p49 = scmp.eq.s32.totalorder %s23, 0
      %p50 = por %p48, %p49
      %s52 = sadd.s32 %s51, 1
      %p55 = scmp.eq.s32.totalorder %s17, 1
      %p56 = scmp.ne.s32.totalorder %s51, %s53
      %p57 = scmp.eq.s32.totalorder %s17, 0
      %p58 = por %p56, %p57
      %p59 = scmp.ne.s32.totalorder %s51, %s53
      %p60 = scmp.eq.s32.totalorder %s22, 1
      %p61 = por %p59, %p60
      %p62 = scmp.ne.s32.totalorder %s53, %s54
      %p63 = scmp.eq.s32.totalorder %s22, 0
      %p64 = por %p62, %p63
      %p65 = scmp.ne.s32.totalorder %s53, %s54
      %p66 = scmp.eq.s32.totalorder %s23, 1
      %p67 = por %p65, %p66
      %p69 = scmp.ne.s32.totalorder %s54, %s68
      %p70 = scmp.eq.s32.totalorder %s23, 0
      %p71 = por %p69, %p70
      %s73 = sadd.s32 %s72, 1
      %p76 = scmp.eq.s32.totalorder %s17, 1
      %p77 = scmp.ne.s32.totalorder %s72, %s74
      %p78 = scmp.eq.s32.totalorder %s17, 0
      %p79 = por %p77, %p78
      %p80 = scmp.ne.s32.totalorder %s72, %s74
      %p81 = scmp.eq.s32.totalorder %s22, 1
      %p82 = por %p80, %p81
      %p83 = scmp.ne.s32.totalorder %s74, %s75
      %p84 = scmp.eq.s32.totalorder %s22, 0
      %p85 = por %p83, %p84
      %p86 = scmp.ne.s32.totalorder %s74, %s75
      %p87 = scmp.eq.s32.totalorder %s23, 1
      %p88 = por %p86, %p87
      %p90 = scmp.ne.s32.totalorder %s75, %s89
      %p91 = scmp.eq.s32.totalorder %s23, 0
      %p92 = por %p90, %p91
      %s94 = sadd.s32 %s93, 1
      %p97 = scmp.eq.s32.totalorder %s17, 1
      %p98 = scmp.ne.s32.totalorder %s93, %s95
      %p99 = scmp.eq.s32.totalorder %s17, 0
      %p100 = por %p98, %p99
      %p101 = scmp.ne.s32.totalorder %s93, %s95
      %p102 = scmp.eq.s32.totalorder %s22, 1
      %p103 = por %p101, %p102
      %p104 = scmp.ne.s32.totalorder %s95, %s96
      %p105 = scmp.eq.s32.totalorder %s22, 0
      %p106 = por %p104, %p105
      %p107 = scmp.ne.s32.totalorder %s95, %s96
      %p108 = scmp.eq.s32.totalorder %s23, 1
      %p109 = por %p107, %p108
      %p111 = scmp.ne.s32.totalorder %s96, %s110
      %p112 = scmp.eq.s32.totalorder %s23, 0
      %p113 = por %p111, %p112
      %s115 = sadd.s32 %s114, 1
      %p118 = scmp.eq.s32.totalorder %s17, 1
      %p119 = scmp.ne.s32.totalorder %s114, %s116
      %p120 = scmp.eq.s32.totalorder %s17, 0
      %p121 = por %p119, %p120
      %p122 = scmp.ne.s32.totalorder %s114, %s116
      %p123 = scmp.eq.s32.totalorder %s22, 1
      %p124 = por %p122, %p123
      %p125 = scmp.ne.s32.totalorder %s116, %s117
      %p126 = scmp.eq.s32.totalorder %s22, 0
      %p127 = por %p125, %p126
      %p128 = scmp.ne.s32.totalorder %s116, %s117
      %p129 = scmp.eq.s32.totalorder %s23, 1
      %p130 = por %p128, %p129
      %p132 = scmp.ne.s32.totalorder %s117, %s131
      %p133 = scmp.eq.s32.totalorder %s23, 0
      %p134 = por %p132, %p133
      %s136 = sadd.s32 %s135, 1
      %p139 = scmp.eq.s32.totalorder %s17, 1
      %p140 = scmp.ne.s32.totalorder %s135, %s137
      %p141 = scmp.eq.s32.totalorder %s17, 0
      %p142 = por %p140, %p141
      %p143 = scmp.ne.s32.totalorder %s135, %s137
      %p144 = scmp.eq.s32.totalorder %s22, 1
      %p145 = por %p143, %p144
      %p146 = scmp.ne.s32.totalorder %s137, %s138
      %p147 = scmp.eq.s32.totalorder %s22, 0
      %p148 = por %p146, %p147
      %p149 = scmp.ne.s32.totalorder %s137, %s138
      %p150 = scmp.eq.s32.totalorder %s23, 1
      %p151 = por %p149, %p150
      %p153 = scmp.ne.s32.totalorder %s138, %s152
      %p154 = scmp.eq.s32.totalorder %s23, 0
      %p155 = por %p153, %p154
      %s157 = sadd.s32 %s156, 1
      %p160 = scmp.eq.s32.totalorder %s17, 1
      %p161 = scmp.ne.s32.totalorder %s156, %s158
      %p162 = scmp.eq.s32.totalorder %s17, 0
      %p163 = por %p161, %p162
      %p164 = scmp.ne.s32.totalorder %s156, %s158
      %p165 = scmp.eq.s32.totalorder %s22, 1
      %p166 = por %p164, %p165
      %p167 = scmp.ne.s32.totalorder %s158, %s159
      %p168 = scmp.eq.s32.totalorder %s22, 0
      %p169 = por %p167, %p168
      %p170 = scmp.ne.s32.totalorder %s158, %s159
      %p171 = scmp.eq.s32.totalorder %s23, 1
      %p172 = por %p170, %p171
      %p174 = scmp.ne.s32.totalorder %s159, %s173
      %p175 = scmp.eq.s32.totalorder %s23, 0
      %p176 = por %p174, %p175
      %s177 = ssub.s32 %s17, %s24
      %p178 = scmp.eq.s32.totalorder %s177, 0
      %s180 = sadd.s32 %s179, 1
      %s181 = scalar_select %p178, %s179, %s180
      %p184 = pneg %p178
      %p185 = scmp.eq.s32.totalorder %s17, 1
      %p186 = por %p184, %p185
      %p187 = scmp.ne.s32.totalorder %s179, %s182
      %p188 = scmp.eq.s32.totalorder %s17, 0
      %p189 = por %p187, %p188
      %p190 = scmp.ne.s32.totalorder %s179, %s182
      %p191 = scmp.eq.s32.totalorder %s22, 1
      %p192 = por %p190, %p191
      %p193 = scmp.ne.s32.totalorder %s182, %s183
      %p194 = scmp.eq.s32.totalorder %s22, 0
      %p195 = por %p193, %p194
      %p196 = scmp.ne.s32.totalorder %s182, %s183
      %p197 = scmp.eq.s32.totalorder %s23, 1
      %p198 = por %p196, %p197
      %p200 = scmp.ne.s32.totalorder %s183, %s199
      %p201 = scmp.eq.s32.totalorder %s23, 0
      %p202 = por %p200, %p201
      %p203 = scmp.le.s32.totalorder 1, %s17
      %p204 = scmp.lt.s32.totalorder %s17, 3
      %p205 = pnand %p203, %p204
      %p206 = pneg %p205
      // Predicated region
      $region9: #{tpu_custom_call.1} parent=5 // pred_check
        _
      $region10: #{tpu_custom_call.1} parent=5 // pred_check_branch
        %208 = sbr.rel (%p205) target = $region12
      $region11: #{tpu_custom_call.1} parent=5 // pred_region
        %s209 = ssub.s32 %s17, 1
        // Predicated region
        $region13: #{tpu_custom_call.1} parent=11 // pred_check
          %p210 = pneg %p64
        $region14: #{tpu_custom_call.1} parent=11 // pred_check_branch
          %212 = sbr.rel (%p210) target = $region16
        $region15: #{tpu_custom_call.1} parent=11 // pred_region
          _
        $region16: #{tpu_custom_call.1} parent=11 // pred_fallthru
          _
        // Predicated region
        $region17: #{tpu_custom_call.1} parent=11 // pred_check
          %p213 = pneg %p85
        $region18: #{tpu_custom_call.1} parent=11 // pred_check_branch
          %215 = sbr.rel (%p213) target = $region20
        $region19: #{tpu_custom_call.1} parent=11 // pred_region
          _
        $region20: #{tpu_custom_call.1} parent=11 // pred_fallthru
          _
        // Predicated region
        $region21: #{tpu_custom_call.1} parent=11 // pred_check
          %p216 = pneg %p106
        $region22: #{tpu_custom_call.1} parent=11 // pred_check_branch
          %218 = sbr.rel (%p216) target = $region24
        $region23: #{tpu_custom_call.1} parent=11 // pred_region
          _
        $region24: #{tpu_custom_call.1} parent=11 // pred_fallthru
          _
        // Predicated region
        $region25: #{tpu_custom_call.1} parent=11 // pred_check
          %p219 = pneg %p127
        $region26: #{tpu_custom_call.1} parent=11 // pred_check_branch
          %221 = sbr.rel (%p219) target = $region28
        $region27: #{tpu_custom_call.1} parent=11 // pred_region
          _
        $region28: #{tpu_custom_call.1} parent=11 // pred_fallthru
          _
        // Predicated region
        $region29: #{tpu_custom_call.1} parent=11 // pred_check
          %p222 = pneg %p148
        $region30: #{tpu_custom_call.1} parent=11 // pred_check_branch
          %224 = sbr.rel (%p222) target = $region32
        $region31: #{tpu_custom_call.1} parent=11 // pred_region
          _
        $region32: #{tpu_custom_call.1} parent=11 // pred_fallthru
          _
        // Predicated region
        $region33: #{tpu_custom_call.1} parent=11 // pred_check
          %p225 = pneg %p169
        $region34: #{tpu_custom_call.1} parent=11 // pred_check_branch
          %227 = sbr.rel (%p225) target = $region36
        $region35: #{tpu_custom_call.1} parent=11 // pred_region
          _
        $region36: #{tpu_custom_call.1} parent=11 // pred_fallthru
          _
      $region12: #{tpu_custom_call.1} parent=5 // pred_fallthru
        _
      %p228 = scmp.lt.s32.totalorder %s17, 2
      // Predicated region
      $region37: #{tpu_custom_call.1} parent=5 // pred_check
        %p229 = pneg %p228
      $region38: #{tpu_custom_call.1} parent=5 // pred_check_branch
        %231 = sbr.rel (%p229) target = $region40
      $region39: #{tpu_custom_call.1} parent=5 // pred_region
        // Predicated region
        $region41: #{tpu_custom_call.1} parent=39 // pred_check
          %p232 = pneg %p37
        $region42: #{tpu_custom_call.1} parent=39 // pred_check_branch
          %234 = sbr.rel (%p232) target = $region44
        $region43: #{tpu_custom_call.1} parent=39 // pred_region
          %s235 = smul.u32 8, %s17
          %p236 = scmp.lt.s32.totalorder %s235, 15
          %s237 = scalar_select %p236, %s235, 15
          %s238 = smul.addr %s237, 8
          %s239 = scalar_lea.vmem %s0, %s238
          %s240 = smul.u32 8, %s17
        $region44: #{tpu_custom_call.1} parent=39 // pred_fallthru
          _
      $region40: #{tpu_custom_call.1} parent=5 // pred_fallthru
        _
      %p241 = scmp.le.s32.totalorder 1, %s17
      %p242 = scmp.lt.s32.totalorder %s17, 3
      %p243 = pnand %p241, %p242
      %p244 = pneg %p243
      // Predicated region
      $region45: #{tpu_custom_call.1} parent=5 // pred_check
        _
      $region46: #{tpu_custom_call.1} parent=5 // pred_check_branch
        %246 = sbr.rel (%p243) target = $region48
      $region47: #{tpu_custom_call.1} parent=5 // pred_region
        %s247 = ssub.s32 %s17, 1
        %s248 = smul.u32 8, %s22
        %p249 = scmp.lt.s32.totalorder %s248, 15
        %s250 = scalar_select %p249, %s248, 15
        %s251 = smul.addr %s250, 8
        %s252 = scalar_lea.vmem %s0, %s251
        %p253 = pneg %p43
        %p254 = pneg %p40
        %p255 = pneg %p64
        %p256 = pneg %p61
        %p257 = pneg %p85
        %p258 = pneg %p82
        %p259 = pneg %p106
        %p260 = pneg %p103
        %p261 = pneg %p127
        %p262 = pneg %p124
        %p263 = pneg %p148
        %p264 = pneg %p145
        %p265 = pneg %p169
        %p266 = pneg %p166
        %p267 = pneg %p195
        %p268 = pneg %p192
        %s269 = sand.u32 %s182, 1
        %s270 = scalar_lea.sflag [#allocation4], %s269
        %s271 = sand.u32 %s182, 1
        %s272 = smul.addr %s271, 64
        %s273 = scalar_lea.vmem [#allocation3], %s272
        %s274 = smul.u32 8, %s22
        %p275 = scmp.lt.s32.totalorder %s274, 15
        %s276 = scalar_select %p275, %s274, 15
        %s277 = smul.addr %s276, 8
        %s278 = scalar_lea.vmem %s0, %s277
        %s279 = smul.u32 8, %s22
        %s280 = smul.u32 8, %s22
        %v282 = vld [vmem:[%s278] sm:$0x1f]
        %v283 = vld [vmem:[%s278 + $0x8] sm:$0x1f]
        %v284 = vld [vmem:[%s278 + $0x10] sm:$0x1f]
        %v285 = vld [vmem:[%s278 + $0x18] sm:$0x1f]
        %v286 = vld [vmem:[%s278 + $0x20] sm:$0x1f]
        %v287 = vld [vmem:[%s278 + $0x28] sm:$0x1f]
        %v288 = vld [vmem:[%s278 + $0x30] sm:$0x1f]
        %v289 = vld [vmem:[%s278 + $0x38] sm:$0x1f]
        %v290 = vlaneseq
        %v291 = vshrl.u32 %v290, 7
        %v292 = vadd.s32 %v291, 8
        %v293 = vadd.s32 %v291, 16
        %v294 = vadd.s32 %v291, 24
        %v295 = vadd.s32 %v291, 32
        %v296 = vlaneseq
        %v297 = vshrl.u32 %v296, 7
        %v298 = vsub.s32 0, %v297
        %v299 = vrot.slane %v282, %v298
        %v300 = vlaneseq
        %v301 = vshrl.u32 %v300, 7
        %v302 = vsub.s32 0, %v301
        %v303 = vrot.slane %v283, %v302
        %v304 = vlaneseq
        %v305 = vshrl.u32 %v304, 7
        %v306 = vsub.s32 0, %v305
        %v307 = vrot.slane %v284, %v306
        %v308 = vlaneseq
        %v309 = vshrl.u32 %v308, 7
        %v310 = vsub.s32 0, %v309
        %v311 = vrot.slane %v285, %v310
        %v312 = vlaneseq
        %v313 = vshrl.u32 %v312, 7
        %v314 = vsub.s32 0, %v313
        %v315 = vrot.slane %v286, %v314
        %v316 = vlaneseq
        %v317 = vshrl.u32 %v316, 7
        %v318 = vsub.s32 0, %v317
        %v319 = vrot.slane %v287, %v318
        %v320 = vlaneseq
        %v321 = vshrl.u32 %v320, 7
        %v322 = vsub.s32 0, %v321
        %v323 = vrot.slane %v288, %v322
        %v324 = vlaneseq
        %v325 = vshrl.u32 %v324, 7
        %v326 = vsub.s32 0, %v325
        %v327 = vrot.slane %v289, %v326
        %vm328 = vcmp.eq.s32.totalorder %v291, %v299
        %vm329 = vcmp.eq.s32.totalorder %v291, %v303
        %vm330 = vcmp.eq.s32.totalorder %v291, %v307
        %vm331 = vcmp.eq.s32.totalorder %v291, %v311
        %vm332 = vcmp.eq.s32.totalorder %v291, %v315
        %vm333 = vcmp.eq.s32.totalorder %v291, %v319
        %vm334 = vcmp.eq.s32.totalorder %v291, %v323
        %vm335 = vcmp.eq.s32.totalorder %v291, %v327
        %vm336 = vcmp.eq.s32.totalorder %v292, %v299
        %vm337 = vcmp.eq.s32.totalorder %v292, %v303
        %vm338 = vcmp.eq.s32.totalorder %v292, %v307
        %vm339 = vcmp.eq.s32.totalorder %v292, %v311
        %vm340 = vcmp.eq.s32.totalorder %v292, %v315
        %vm341 = vcmp.eq.s32.totalorder %v292, %v319
        %vm342 = vcmp.eq.s32.totalorder %v292, %v323
        %vm343 = vcmp.eq.s32.totalorder %v292, %v327
        %vm344 = vcmp.eq.s32.totalorder %v293, %v299
        %vm345 = vcmp.eq.s32.totalorder %v293, %v303
        %vm346 = vcmp.eq.s32.totalorder %v293, %v307
        %vm347 = vcmp.eq.s32.totalorder %v293, %v311
        %vm348 = vcmp.eq.s32.totalorder %v293, %v315
        %vm349 = vcmp.eq.s32.totalorder %v293, %v319
        %vm350 = vcmp.eq.s32.totalorder %v293, %v323
        %vm351 = vcmp.eq.s32.totalorder %v293, %v327
        %vm352 = vcmp.eq.s32.totalorder %v294, %v299
        %vm353 = vcmp.eq.s32.totalorder %v294, %v303
        %vm354 = vcmp.eq.s32.totalorder %v294, %v307
        %vm355 = vcmp.eq.s32.totalorder %v294, %v311
        %vm356 = vcmp.eq.s32.totalorder %v294, %v315
        %vm357 = vcmp.eq.s32.totalorder %v294, %v319
        %vm358 = vcmp.eq.s32.totalorder %v294, %v323
        %vm359 = vcmp.eq.s32.totalorder %v294, %v327
        %vm360 = vcmp.eq.s32.totalorder %v295, %v299
        %vm361 = vcmp.eq.s32.totalorder %v295, %v303
        %vm362 = vcmp.eq.s32.totalorder %v295, %v307
        %vm363 = vcmp.eq.s32.totalorder %v295, %v311
        %vm364 = vcmp.eq.s32.totalorder %v295, %v315
        %vm365 = vcmp.eq.s32.totalorder %v295, %v319
        %vm366 = vcmp.eq.s32.totalorder %v295, %v323
        %vm367 = vcmp.eq.s32.totalorder %v295, %v327
        %v368 = vlaneseq
        %v369 = vshrl.u32 %v368, 7
        %v370 = vsub.s32 1, %v369
        %v371 = vrot.slane %v282, %v370
        %v372 = vlaneseq
        %v373 = vshrl.u32 %v372, 7
        %v374 = vsub.s32 1, %v373
        %v375 = vrot.slane %v283, %v374
        %v376 = vlaneseq
        %v377 = vshrl.u32 %v376, 7
        %v378 = vsub.s32 1, %v377
        %v379 = vrot.slane %v284, %v378
        %v380 = vlaneseq
        %v381 = vshrl.u32 %v380, 7
        %v382 = vsub.s32 1, %v381
        %v383 = vrot.slane %v285, %v382
        %v384 = vlaneseq
        %v385 = vshrl.u32 %v384, 7
        %v386 = vsub.s32 1, %v385
        %v387 = vrot.slane %v286, %v386
        %v388 = vlaneseq
        %v389 = vshrl.u32 %v388, 7
        %v390 = vsub.s32 1, %v389
        %v391 = vrot.slane %v287, %v390
        %v392 = vlaneseq
        %v393 = vshrl.u32 %v392, 7
        %v394 = vsub.s32 1, %v393
        %v395 = vrot.slane %v288, %v394
        %v396 = vlaneseq
        %v397 = vshrl.u32 %v396, 7
        %v398 = vsub.s32 1, %v397
        %v399 = vrot.slane %v289, %v398
        %vm400 = vcmp.eq.s32.totalorder %v291, %v371
        %vm401 = vcmp.eq.s32.totalorder %v291, %v375
        %vm402 = vcmp.eq.s32.totalorder %v291, %v379
        %vm403 = vcmp.eq.s32.totalorder %v291, %v383
        %vm404 = vcmp.eq.s32.totalorder %v291, %v387
        %vm405 = vcmp.eq.s32.totalorder %v291, %v391
        %vm406 = vcmp.eq.s32.totalorder %v291, %v395
        %vm407 = vcmp.eq.s32.totalorder %v291, %v399
        %vm408 = vcmp.eq.s32.totalorder %v292, %v371
        %vm409 = vcmp.eq.s32.totalorder %v292, %v375
        %vm410 = vcmp.eq.s32.totalorder %v292, %v379
        %vm411 = vcmp.eq.s32.totalorder %v292, %v383
        %vm412 = vcmp.eq.s32.totalorder %v292, %v387
        %vm413 = vcmp.eq.s32.totalorder %v292, %v391
        %vm414 = vcmp.eq.s32.totalorder %v292, %v395
        %vm415 = vcmp.eq.s32.totalorder %v292, %v399
        %vm416 = vcmp.eq.s32.totalorder %v293, %v371
        %vm417 = vcmp.eq.s32.totalorder %v293, %v375
        %vm418 = vcmp.eq.s32.totalorder %v293, %v379
        %vm419 = vcmp.eq.s32.totalorder %v293, %v383
        %vm420 = vcmp.eq.s32.totalorder %v293, %v387
        %vm421 = vcmp.eq.s32.totalorder %v293, %v391
        %vm422 = vcmp.eq.s32.totalorder %v293, %v395
        %vm423 = vcmp.eq.s32.totalorder %v293, %v399
        %vm424 = vcmp.eq.s32.totalorder %v294, %v371
        %vm425 = vcmp.eq.s32.totalorder %v294, %v375
        %vm426 = vcmp.eq.s32.totalorder %v294, %v379
        %vm427 = vcmp.eq.s32.totalorder %v294, %v383
        %vm428 = vcmp.eq.s32.totalorder %v294, %v387
        %vm429 = vcmp.eq.s32.totalorder %v294, %v391
        %vm430 = vcmp.eq.s32.totalorder %v294, %v395
        %vm431 = vcmp.eq.s32.totalorder %v294, %v399
        %vm432 = vcmp.eq.s32.totalorder %v295, %v371
        %vm433 = vcmp.eq.s32.totalorder %v295, %v375
        %vm434 = vcmp.eq.s32.totalorder %v295, %v379
        %vm435 = vcmp.eq.s32.totalorder %v295, %v383
        %vm436 = vcmp.eq.s32.totalorder %v295, %v387
        %vm437 = vcmp.eq.s32.totalorder %v295, %v391
        %vm438 = vcmp.eq.s32.totalorder %v295, %v395
        %vm439 = vcmp.eq.s32.totalorder %v295, %v399
        %vm440 = vmor %vm328, %vm400
        %vm441 = vmor %vm329, %vm401
        %vm442 = vmor %vm330, %vm402
        %vm443 = vmor %vm331, %vm403
        %vm444 = vmor %vm332, %vm404
        %vm445 = vmor %vm333, %vm405
        %vm446 = vmor %vm334, %vm406
        %vm447 = vmor %vm335, %vm407
        %vm448 = vmor %vm336, %vm408
        %vm449 = vmor %vm337, %vm409
        %vm450 = vmor %vm338, %vm410
        %vm451 = vmor %vm339, %vm411
        %vm452 = vmor %vm340, %vm412
        %vm453 = vmor %vm341, %vm413
        %vm454 = vmor %vm342, %vm414
        %vm455 = vmor %vm343, %vm415
        %vm456 = vmor %vm344, %vm416
        %vm457 = vmor %vm345, %vm417
        %vm458 = vmor %vm346, %vm418
        %vm459 = vmor %vm347, %vm419
        %vm460 = vmor %vm348, %vm420
        %vm461 = vmor %vm349, %vm421
        %vm462 = vmor %vm350, %vm422
        %vm463 = vmor %vm351, %vm423
        %vm464 = vmor %vm352, %vm424
        %vm465 = vmor %vm353, %vm425
        %vm466 = vmor %vm354, %vm426
        %vm467 = vmor %vm355, %vm427
        %vm468 = vmor %vm356, %vm428
        %vm469 = vmor %vm357, %vm429
        %vm470 = vmor %vm358, %vm430
        %vm471 = vmor %vm359, %vm431
        %vm472 = vmor %vm360, %vm432
        %vm473 = vmor %vm361, %vm433
        %vm474 = vmor %vm362, %vm434
        %vm475 = vmor %vm363, %vm435
        %vm476 = vmor %vm364, %vm436
        %vm477 = vmor %vm365, %vm437
        %vm478 = vmor %vm366, %vm438
        %vm479 = vmor %vm367, %vm439
        %v480 = vlaneseq
        %v481 = vshrl.u32 %v480, 7
        %v482 = vsub.s32 2, %v481
        %v483 = vrot.slane %v282, %v482
        %v484 = vlaneseq
        %v485 = vshrl.u32 %v484, 7
        %v486 = vsub.s32 2, %v485
        %v487 = vrot.slane %v283, %v486
        %v488 = vlaneseq
        %v489 = vshrl.u32 %v488, 7
        %v490 = vsub.s32 2, %v489
        %v491 = vrot.slane %v284, %v490
        %v492 = vlaneseq
        %v493 = vshrl.u32 %v492, 7
        %v494 = vsub.s32 2, %v493
        %v495 = vrot.slane %v285, %v494
        %v496 = vlaneseq
        %v497 = vshrl.u32 %v496, 7
        %v498 = vsub.s32 2, %v497
        %v499 = vrot.slane %v286, %v498
        %v500 = vlaneseq
        %v501 = vshrl.u32 %v500, 7
        %v502 = vsub.s32 2, %v501
        %v503 = vrot.slane %v287, %v502
        %v504 = vlaneseq
        %v505 = vshrl.u32 %v504, 7
        %v506 = vsub.s32 2, %v505
        %v507 = vrot.slane %v288, %v506
        %v508 = vlaneseq
        %v509 = vshrl.u32 %v508, 7
        %v510 = vsub.s32 2, %v509
        %v511 = vrot.slane %v289, %v510
        %vm512 = vcmp.eq.s32.totalorder %v291, %v483
        %vm513 = vcmp.eq.s32.totalorder %v291, %v487
        %vm514 = vcmp.eq.s32.totalorder %v291, %v491
        %vm515 = vcmp.eq.s32.totalorder %v291, %v495
        %vm516 = vcmp.eq.s32.totalorder %v291, %v499
        %vm517 = vcmp.eq.s32.totalorder %v291, %v503
        %vm518 = vcmp.eq.s32.totalorder %v291, %v507
        %vm519 = vcmp.eq.s32.totalorder %v291, %v511
        %vm520 = vcmp.eq.s32.totalorder %v292, %v483
        %vm521 = vcmp.eq.s32.totalorder %v292, %v487
        %vm522 = vcmp.eq.s32.totalorder %v292, %v491
        %vm523 = vcmp.eq.s32.totalorder %v292, %v495
        %vm524 = vcmp.eq.s32.totalorder %v292, %v499
        %vm525 = vcmp.eq.s32.totalorder %v292, %v503
        %vm526 = vcmp.eq.s32.totalorder %v292, %v507
        %vm527 = vcmp.eq.s32.totalorder %v292, %v511
        %vm528 = vcmp.eq.s32.totalorder %v293, %v483
        %vm529 = vcmp.eq.s32.totalorder %v293, %v487
        %vm530 = vcmp.eq.s32.totalorder %v293, %v491
        %vm531 = vcmp.eq.s32.totalorder %v293, %v495
        %vm532 = vcmp.eq.s32.totalorder %v293, %v499
        %vm533 = vcmp.eq.s32.totalorder %v293, %v503
        %vm534 = vcmp.eq.s32.totalorder %v293, %v507
        %vm535 = vcmp.eq.s32.totalorder %v293, %v511
        %vm536 = vcmp.eq.s32.totalorder %v294, %v483
        %vm537 = vcmp.eq.s32.totalorder %v294, %v487
        %vm538 = vcmp.eq.s32.totalorder %v294, %v491
        %vm539 = vcmp.eq.s32.totalorder %v294, %v495
        %vm540 = vcmp.eq.s32.totalorder %v294, %v499
        %vm541 = vcmp.eq.s32.totalorder %v294, %v503
        %vm542 = vcmp.eq.s32.totalorder %v294, %v507
        %vm543 = vcmp.eq.s32.totalorder %v294, %v511
        %vm544 = vcmp.eq.s32.totalorder %v295, %v483
        %vm545 = vcmp.eq.s32.totalorder %v295, %v487
        %vm546 = vcmp.eq.s32.totalorder %v295, %v491
        %vm547 = vcmp.eq.s32.totalorder %v295, %v495
        %vm548 = vcmp.eq.s32.totalorder %v295, %v499
        %vm549 = vcmp.eq.s32.totalorder %v295, %v503
        %vm550 = vcmp.eq.s32.totalorder %v295, %v507
        %vm551 = vcmp.eq.s32.totalorder %v295, %v511
        %vm552 = vmor %vm440, %vm512
        %vm553 = vmor %vm441, %vm513
        %vm554 = vmor %vm442, %vm514
        %vm555 = vmor %vm443, %vm515
        %vm556 = vmor %vm444, %vm516
        %vm557 = vmor %vm445, %vm517
        %vm558 = vmor %vm446, %vm518
        %vm559 = vmor %vm447, %vm519
        %vm560 = vmor %vm448, %vm520
        %vm561 = vmor %vm449, %vm521
        %vm562 = vmor %vm450, %vm522
        %vm563 = vmor %vm451, %vm523
        %vm564 = vmor %vm452, %vm524
        %vm565 = vmor %vm453, %vm525
        %vm566 = vmor %vm454, %vm526
        %vm567 = vmor %vm455, %vm527
        %vm568 = vmor %vm456, %vm528
        %vm569 = vmor %vm457, %vm529
        %vm570 = vmor %vm458, %vm530
        %vm571 = vmor %vm459, %vm531
        %vm572 = vmor %vm460, %vm532
        %vm573 = vmor %vm461, %vm533
        %vm574 = vmor %vm462, %vm534
        %vm575 = vmor %vm463, %vm535
        %vm576 = vmor %vm464, %vm536
        %vm577 = vmor %vm465, %vm537
        %vm578 = vmor %vm466, %vm538
        %vm579 = vmor %vm467, %vm539
        %vm580 = vmor %vm468, %vm540
        %vm581 = vmor %vm469, %vm541
        %vm582 = vmor %vm470, %vm542
        %vm583 = vmor %vm471, %vm543
        %vm584 = vmor %vm472, %vm544
        %vm585 = vmor %vm473, %vm545
        %vm586 = vmor %vm474, %vm546
        %vm587 = vmor %vm475, %vm547
        %vm588 = vmor %vm476, %vm548
        %vm589 = vmor %vm477, %vm549
        %vm590 = vmor %vm478, %vm550
        %vm591 = vmor %vm479, %vm551
        %v592 = vlaneseq
        %v593 = vshrl.u32 %v592, 7
        %v594 = vsub.s32 3, %v593
        %v595 = vrot.slane %v282, %v594
        %v596 = vlaneseq
        %v597 = vshrl.u32 %v596, 7
        %v598 = vsub.s32 3, %v597
        %v599 = vrot.slane %v283, %v598
        %v600 = vlaneseq
        %v601 = vshrl.u32 %v600, 7
        %v602 = vsub.s32 3, %v601
        %v603 = vrot.slane %v284, %v602
        %v604 = vlaneseq
        %v605 = vshrl.u32 %v604, 7
        %v606 = vsub.s32 3, %v605
        %v607 = vrot.slane %v285, %v606
        %v608 = vlaneseq
        %v609 = vshrl.u32 %v608, 7
        %v610 = vsub.s32 3, %v609
        %v611 = vrot.slane %v286, %v610
        %v612 = vlaneseq
        %v613 = vshrl.u32 %v612, 7
        %v614 = vsub.s32 3, %v613
        %v615 = vrot.slane %v287, %v614
        %v616 = vlaneseq
        %v617 = vshrl.u32 %v616, 7
        %v618 = vsub.s32 3, %v617
        %v619 = vrot.slane %v288, %v618
        %v620 = vlaneseq
        %v621 = vshrl.u32 %v620, 7
        %v622 = vsub.s32 3, %v621
        %v623 = vrot.slane %v289, %v622
        %vm624 = vcmp.eq.s32.totalorder %v291, %v595
        %vm625 = vcmp.eq.s32.totalorder %v291, %v599
        %vm626 = vcmp.eq.s32.totalorder %v291, %v603
        %vm627 = vcmp.eq.s32.totalorder %v291, %v607
        %vm628 = vcmp.eq.s32.totalorder %v291, %v611
        %vm629 = vcmp.eq.s32.totalorder %v291, %v615
        %vm630 = vcmp.eq.s32.totalorder %v291, %v619
        %vm631 = vcmp.eq.s32.totalorder %v291, %v623
        %vm632 = vcmp.eq.s32.totalorder %v292, %v595
        %vm633 = vcmp.eq.s32.totalorder %v292, %v599
        %vm634 = vcmp.eq.s32.totalorder %v292, %v603
        %vm635 = vcmp.eq.s32.totalorder %v292, %v607
        %vm636 = vcmp.eq.s32.totalorder %v292, %v611
        %vm637 = vcmp.eq.s32.totalorder %v292, %v615
        %vm638 = vcmp.eq.s32.totalorder %v292, %v619
        %vm639 = vcmp.eq.s32.totalorder %v292, %v623
        %vm640 = vcmp.eq.s32.totalorder %v293, %v595
        %vm641 = vcmp.eq.s32.totalorder %v293, %v599
        %vm642 = vcmp.eq.s32.totalorder %v293, %v603
        %vm643 = vcmp.eq.s32.totalorder %v293, %v607
        %vm644 = vcmp.eq.s32.totalorder %v293, %v611
        %vm645 = vcmp.eq.s32.totalorder %v293, %v615
        %vm646 = vcmp.eq.s32.totalorder %v293, %v619
        %vm647 = vcmp.eq.s32.totalorder %v293, %v623
        %vm648 = vcmp.eq.s32.totalorder %v294, %v595
        %vm649 = vcmp.eq.s32.totalorder %v294, %v599
        %vm650 = vcmp.eq.s32.totalorder %v294, %v603
        %vm651 = vcmp.eq.s32.totalorder %v294, %v607
        %vm652 = vcmp.eq.s32.totalorder %v294, %v611
        %vm653 = vcmp.eq.s32.totalorder %v294, %v615
        %vm654 = vcmp.eq.s32.totalorder %v294, %v619
        %vm655 = vcmp.eq.s32.totalorder %v294, %v623
        %vm656 = vcmp.eq.s32.totalorder %v295, %v595
        %vm657 = vcmp.eq.s32.totalorder %v295, %v599
        %vm658 = vcmp.eq.s32.totalorder %v295, %v603
        %vm659 = vcmp.eq.s32.totalorder %v295, %v607
        %vm660 = vcmp.eq.s32.totalorder %v295, %v611
        %vm661 = vcmp.eq.s32.totalorder %v295, %v615
        %vm662 = vcmp.eq.s32.totalorder %v295, %v619
        %vm663 = vcmp.eq.s32.totalorder %v295, %v623
        %vm664 = vmor %vm552, %vm624
        %vm665 = vmor %vm553, %vm625
        %vm666 = vmor %vm554, %vm626
        %vm667 = vmor %vm555, %vm627
        %vm668 = vmor %vm556, %vm628
        %vm669 = vmor %vm557, %vm629
        %vm670 = vmor %vm558, %vm630
        %vm671 = vmor %vm559, %vm631
        %vm672 = vmor %vm560, %vm632
        %vm673 = vmor %vm561, %vm633
        %vm674 = vmor %vm562, %vm634
        %vm675 = vmor %vm563, %vm635
        %vm676 = vmor %vm564, %vm636
        %vm677 = vmor %vm565, %vm637
        %vm678 = vmor %vm566, %vm638
        %vm679 = vmor %vm567, %vm639
        %vm680 = vmor %vm568, %vm640
        %vm681 = vmor %vm569, %vm641
        %vm682 = vmor %vm570, %vm642
        %vm683 = vmor %vm571, %vm643
        %vm684 = vmor %vm572, %vm644
        %vm685 = vmor %vm573, %vm645
        %vm686 = vmor %vm574, %vm646
        %vm687 = vmor %vm575, %vm647
        %vm688 = vmor %vm576, %vm648
        %vm689 = vmor %vm577, %vm649
        %vm690 = vmor %vm578, %vm650
        %vm691 = vmor %vm579, %vm651
        %vm692 = vmor %vm580, %vm652
        %vm693 = vmor %vm581, %vm653
        %vm694 = vmor %vm582, %vm654
        %vm695 = vmor %vm583, %vm655
        %vm696 = vmor %vm584, %vm656
        %vm697 = vmor %vm585, %vm657
        %vm698 = vmor %vm586, %vm658
        %vm699 = vmor %vm587, %vm659
        %vm700 = vmor %vm588, %vm660
        %vm701 = vmor %vm589, %vm661
        %vm702 = vmor %vm590, %vm662
        %vm703 = vmor %vm591, %vm663
        %v704 = vsel %vm664, 1, 0
        %v705 = vsel %vm665, 1, 0
        %v706 = vsel %vm666, 1, 0
        %v707 = vsel %vm667, 1, 0
        %v708 = vsel %vm668, 1, 0
        %v709 = vsel %vm669, 1, 0
        %v710 = vsel %vm670, 1, 0
        %v711 = vsel %vm671, 1, 0
        %v712 = vsel %vm672, 1, 0
        %v713 = vsel %vm673, 1, 0
        %v714 = vsel %vm674, 1, 0
        %v715 = vsel %vm675, 1, 0
        %v716 = vsel %vm676, 1, 0
        %v717 = vsel %vm677, 1, 0
        %v718 = vsel %vm678, 1, 0
        %v719 = vsel %vm679, 1, 0
        %v720 = vsel %vm680, 1, 0
        %v721 = vsel %vm681, 1, 0
        %v722 = vsel %vm682, 1, 0
        %v723 = vsel %vm683, 1, 0
        %v724 = vsel %vm684, 1, 0
        %v725 = vsel %vm685, 1, 0
        %v726 = vsel %vm686, 1, 0
        %v727 = vsel %vm687, 1, 0
        %v728 = vsel %vm688, 1, 0
        %v729 = vsel %vm689, 1, 0
        %v730 = vsel %vm690, 1, 0
        %v731 = vsel %vm691, 1, 0
        %v732 = vsel %vm692, 1, 0
        %v733 = vsel %vm693, 1, 0
        %v734 = vsel %vm694, 1, 0
        %v735 = vsel %vm695, 1, 0
        %v736 = vsel %vm696, 1, 0
        %v737 = vsel %vm697, 1, 0
        %v738 = vsel %vm698, 1, 0
        %v739 = vsel %vm699, 1, 0
        %v740 = vsel %vm700, 1, 0
        %v741 = vsel %vm701, 1, 0
        %v742 = vsel %vm702, 1, 0
        %v743 = vsel %vm703, 1, 0
        %v744 = vcvt.s32.f32 %v704
        %v745 = vcvt.s32.f32 %v705
        %v746 = vcvt.s32.f32 %v706
        %v747 = vcvt.s32.f32 %v707
        %v748 = vcvt.s32.f32 %v708
        %v749 = vcvt.s32.f32 %v709
        %v750 = vcvt.s32.f32 %v710
        %v751 = vcvt.s32.f32 %v711
        %v752 = vcvt.s32.f32 %v712
        %v753 = vcvt.s32.f32 %v713
        %v754 = vcvt.s32.f32 %v714
        %v755 = vcvt.s32.f32 %v715
        %v756 = vcvt.s32.f32 %v716
        %v757 = vcvt.s32.f32 %v717
        %v758 = vcvt.s32.f32 %v718
        %v759 = vcvt.s32.f32 %v719
        %v760 = vcvt.s32.f32 %v720
        %v761 = vcvt.s32.f32 %v721
        %v762 = vcvt.s32.f32 %v722
        %v763 = vcvt.s32.f32 %v723
        %v764 = vcvt.s32.f32 %v724
        %v765 = vcvt.s32.f32 %v725
        %v766 = vcvt.s32.f32 %v726
        %v767 = vcvt.s32.f32 %v727
        %v768 = vcvt.s32.f32 %v728
        %v769 = vcvt.s32.f32 %v729
        %v770 = vcvt.s32.f32 %v730
        %v771 = vcvt.s32.f32 %v731
        %v772 = vcvt.s32.f32 %v732
        %v773 = vcvt.s32.f32 %v733
        %v774 = vcvt.s32.f32 %v734
        %v775 = vcvt.s32.f32 %v735
        %v776 = vcvt.s32.f32 %v736
        %v777 = vcvt.s32.f32 %v737
        %v778 = vcvt.s32.f32 %v738
        %v779 = vcvt.s32.f32 %v739
        %v780 = vcvt.s32.f32 %v740
        %v781 = vcvt.s32.f32 %v741
        %v782 = vcvt.s32.f32 %v742
        %v783 = vcvt.s32.f32 %v743
        %v784 = vpack.c.bf16 %v752, %v744
        %v785 = vpack.c.bf16 %v753, %v745
        %v786 = vpack.c.bf16 %v754, %v746
        %v787 = vpack.c.bf16 %v755, %v747
        %v788 = vpack.c.bf16 %v756, %v748
        %v789 = vpack.c.bf16 %v757, %v749
        %v790 = vpack.c.bf16 %v758, %v750
        %v791 = vpack.c.bf16 %v759, %v751
        %v792 = vpack.c.bf16 %v768, %v760
        %v793 = vpack.c.bf16 %v769, %v761
        %v794 = vpack.c.bf16 %v770, %v762
        %v795 = vpack.c.bf16 %v771, %v763
        %v796 = vpack.c.bf16 %v772, %v764
        %v797 = vpack.c.bf16 %v773, %v765
        %v798 = vpack.c.bf16 %v774, %v766
        %v799 = vpack.c.bf16 %v775, %v767
        %v800 = vpack.c.bf16 %v776, %v776
        %v801 = vpack.c.bf16 %v777, %v777
        %v802 = vpack.c.bf16 %v778, %v778
        %v803 = vpack.c.bf16 %v779, %v779
        %v804 = vpack.c.bf16 %v780, %v780
        %v805 = vpack.c.bf16 %v781, %v781
        %v806 = vpack.c.bf16 %v782, %v782
        %v807 = vpack.c.bf16 %v783, %v783
        %v808 = vld [vmem:[%s1] sm:$0xf]
        %v809 = vld [vmem:[%s1 + $0x4] sm:$0xf]
        %v810 = vld [vmem:[%s1 + $0x8] sm:$0xf]
        %v811 = vld [vmem:[%s1 + $0xc] sm:$0xf]
        %v812 = vld [vmem:[%s1 + $0x10] sm:$0xf]
        %v813 = vld [vmem:[%s1 + $0x14] sm:$0xf]
        %v814 = vld [vmem:[%s1 + $0x18] sm:$0xf]
        %v815 = vld [vmem:[%s1 + $0x1c] sm:$0xf]
        %v816 = vld [vmem:[%s1 + $0x20] sm:$0x1]
        %v826 = vunpack.c.l.b16 %v808
        %v827 = vunpack.c.l.b16 %v809
        %v828 = vunpack.c.l.b16 %v810
        %v829 = vunpack.c.l.b16 %v811
        %v830 = vunpack.c.l.b16 %v812
        %v831 = vunpack.c.l.b16 %v813
        %v832 = vunpack.c.l.b16 %v814
        %v833 = vunpack.c.l.b16 %v815
        %v834 = vunpack.c.l.b16 %v816
        %v835 = vpack.c.b16 %v827, %v826
        %v836 = vpack.c.b16 %v829, %v828
        %v837 = vpack.c.b16 %v831, %v830
        %v838 = vpack.c.b16 %v833, %v832
        %v839 = vpack.c.b16 %v834, %v834
        %vm840 = vcmask 326656
        %v842 = vsel %vm840, %v835, 0
        %v845 = vsel %vm840, %v836, 0
        %v848 = vsel %vm840, %v837, 0
        %v851 = vsel %vm840, %v838, 0
        %v854 = vsel %vm840, %v839, 0
        %vm856 = vcmask 1043456
        %v858 = vsel %vm856, %v800, 0
        %v861 = vsel %vm856, %v801, 0
        %v864 = vsel %vm856, %v802, 0
        %v867 = vsel %vm856, %v803, 0
        %v870 = vsel %vm856, %v804, 0
        %v873 = vsel %vm856, %v805, 0
        %v876 = vsel %vm856, %v806, 0
        %v879 = vsel %vm856, %v807, 0
        %881 = vmatprep.subr.bf16.mxu0 %v785
        %882 = vmatpush1.bf16.msra.mxu0 %v784
        %883 = vmatprep.subr.bf16.mxu0 %v793
        %884 = vmatpush1.bf16.msra.mxu0 %v792
        %885 = vmatprep.subr.bf16.mxu0 %v861
        %886 = vmatpush1.bf16.msra.mxu0 %v858
        %887 = vmatprep.subr.bf16.mxu0 0
        %888 = vmatpush1.bf16.msra.mxu0 0
        %889 = vmatprep.subr.bf16.mxu0 0
        %890 = vmatpush1.bf16.msra.mxu0 0
        %891 = vmatprep.subr.bf16.mxu0 0
        %892 = vmatpush1.bf16.msra.mxu0 0
        %893 = vmatprep.subr.bf16.mxu0 0
        %894 = vmatpush1.bf16.msra.mxu0 0
        %895 = vmatprep.subr.bf16.mxu0 0
        %896 = vmatpush1.bf16.msra.mxu0 0
        %897 = vmatprep.subr.bf16.mxu0 0
        %898 = vmatpush1.bf16.msra.mxu0 0
        %899 = vmatprep.subr.bf16.mxu0 0
        %900 = vmatpush1.bf16.msra.mxu0 0
        %901 = vmatprep.subr.bf16.mxu0 0
        %902 = vmatpush1.bf16.msra.mxu0 0
        %903 = vmatprep.subr.bf16.mxu0 0
        %904 = vmatpush1.bf16.msra.mxu0 0
        %905 = vmatprep.subr.bf16.mxu0 0
        %906 = vmatpush1.bf16.msra.mxu0 0
        %907 = vmatprep.subr.bf16.mxu0 0
        %908 = vmatpush1.bf16.msra.mxu0 0
        %909 = vmatprep.subr.bf16.mxu0 0
        %910 = vmatpush1.bf16.msra.mxu0 0
        %911 = vmatprep.subr.bf16.mxu0 0
        %912 = vmatpush1.bf16.msra.mxu0 0
        %913 = vmatprep.mubr.bf16.mxu0 0
        %914 = vmatmul.mubr.bf16.gmra.mrb[0].mxu0 %v842
        %v915 = vpop.f32.mrb[0].mxu0
        %v916 = vadd.f32 0.0, %v915
        %v917 = vpop.f32.mrb[0].mxu0
        %v918 = vadd.f32 0.0, %v917
        %v919 = vpop.f32.mrb[0].mxu0
        %v920 = vadd.f32 0.0, %v919
        %v921 = vpop.f32.mrb[0].mxu0
        %v922 = vadd.f32 0.0, %v921
        %923 = vmatprep.mubr.bf16.mxu0 0
        %924 = vmatmul.mubr.bf16.gmra.mrb[0].mxu0 %v845
        %v925 = vpop.f32.mrb[0].mxu0
        %v926 = vadd.f32 0.0, %v925
        %v927 = vpop.f32.mrb[0].mxu0
        %v928 = vadd.f32 0.0, %v927
        %v929 = vpop.f32.mrb[0].mxu0
        %v930 = vadd.f32 0.0, %v929
        %v931 = vpop.f32.mrb[0].mxu0
        %v932 = vadd.f32 0.0, %v931
        %933 = vmatprep.mubr.bf16.mxu0 0
        %934 = vmatmul.mubr.bf16.gmra.mrb[0].mxu0 %v848
        %v935 = vpop.f32.mrb[0].mxu0
        %v936 = vadd.f32 0.0, %v935
        %v937 = vpop.f32.mrb[0].mxu0
        %v938 = vadd.f32 0.0, %v937
        %v939 = vpop.f32.mrb[0].mxu0
        %v940 = vadd.f32 0.0, %v939
        %v941 = vpop.f32.mrb[0].mxu0
        %v942 = vadd.f32 0.0, %v941
        %943 = vmatprep.mubr.bf16.mxu0 0
        %944 = vmatmul.mubr.bf16.gmra.mrb[0].mxu0 %v851
        %v945 = vpop.f32.mrb[0].mxu0
        %v946 = vadd.f32 0.0, %v945
        %v947 = vpop.f32.mrb[0].mxu0
        %v948 = vadd.f32 0.0, %v947
        %v949 = vpop.f32.mrb[0].mxu0
        %v950 = vadd.f32 0.0, %v949
        %v951 = vpop.f32.mrb[0].mxu0
        %v952 = vadd.f32 0.0, %v951
        %953 = vmatprep.mubr.bf16.mxu0 0
        %954 = vmatmul.mubr.bf16.gmra.mrb[0].mxu0 %v854
        %v955 = vpop.f32.mrb[0].mxu0
        %v956 = vadd.f32 0.0, %v955
        %v957 = vpop.f32.mrb[0].mxu0
        %v958 = vadd.f32 0.0, %v957
        %v959 = vpop.f32.mrb[0].mxu0
        %v960 = vpop.f32.mrb[0].mxu0
        %961 = vdwg.mxu0
        %962 = vmatprep.subr.bf16.mxu0 %v787
        %963 = vmatpush1.bf16.msra.mxu0 %v786
        %964 = vmatprep.subr.bf16.mxu0 %v795
        %965 = vmatpush1.bf16.msra.mxu0 %v794
        %966 = vmatprep.subr.bf16.mxu0 %v867
        %967 = vmatpush1.bf16.msra.mxu0 %v864
        %968 = vmatprep.subr.bf16.mxu0 0
        %969 = vmatpush1.bf16.msra.mxu0 0
        %970 = vmatprep.subr.bf16.mxu0 0
        %971 = vmatpush1.bf16.msra.mxu0 0
        %972 = vmatprep.subr.bf16.mxu0 0
        %973 = vmatpush1.bf16.msra.mxu0 0
        %974 = vmatprep.subr.bf16.mxu0 0
        %975 = vmatpush1.bf16.msra.mxu0 0
        %976 = vmatprep.subr.bf16.mxu0 0
        %977 = vmatpush1.bf16.msra.mxu0 0
        %978 = vmatprep.subr.bf16.mxu0 0
        %979 = vmatpush1.bf16.msra.mxu0 0
        %980 = vmatprep.subr.bf16.mxu0 0
        %981 = vmatpush1.bf16.msra.mxu0 0
        %982 = vmatprep.subr.bf16.mxu0 0
        %983 = vmatpush1.bf16.msra.mxu0 0
        %984 = vmatprep.subr.bf16.mxu0 0
        %985 = vmatpush1.bf16.msra.mxu0 0
        %986 = vmatprep.subr.bf16.mxu0 0
        %987 = vmatpush1.bf16.msra.mxu0 0
        %988 = vmatprep.subr.bf16.mxu0 0
        %989 = vmatpush1.bf16.msra.mxu0 0
        %990 = vmatprep.subr.bf16.mxu0 0
        %991 = vmatpush1.bf16.msra.mxu0 0
        %992 = vmatprep.subr.bf16.mxu0 0
        %993 = vmatpush1.bf16.msra.mxu0 0
        %994 = vmatprep.mubr.bf16.mxu0 0
        %995 = vmatmul.mubr.bf16.gmra.mrb[0].mxu0 %v842
        %v996 = vpop.f32.mrb[0].mxu0
        %v997 = vadd.f32 0.0, %v996
        %v998 = vpop.f32.mrb[0].mxu0
        %v999 = vadd.f32 0.0, %v998
        %v1000 = vpop.f32.mrb[0].mxu0
        %v1001 = vadd.f32 0.0, %v1000
        %v1002 = vpop.f32.mrb[0].mxu0
        %v1003 = vadd.f32 0.0, %v1002
        %1004 = vmatprep.mubr.bf16.mxu0 0
        %1005 = vmatmul.mubr.bf16.gmra.mrb[0].mxu0 %v845
        %v1006 = vpop.f32.mrb[0].mxu0
        %v1007 = vadd.f32 0.0, %v1006
        %v1008 = vpop.f32.mrb[0].mxu0
        %v1009 = vadd.f32 0.0, %v1008
        %v1010 = vpop.f32.mrb[0].mxu0
        %v1011 = vadd.f32 0.0, %v1010
        %v1012 = vpop.f32.mrb[0].mxu0
        %v1013 = vadd.f32 0.0, %v1012
        %1014 = vmatprep.mubr.bf16.mxu0 0
        %1015 = vmatmul.mubr.bf16.gmra.mrb[0].mxu0 %v848
        %v1016 = vpop.f32.mrb[0].mxu0
        %v1017 = vadd.f32 0.0, %v1016
        %v1018 = vpop.f32.mrb[0].mxu0
        %v1019 = vadd.f32 0.0, %v1018
        %v1020 = vpop.f32.mrb[0].mxu0
        %v1021 = vadd.f32 0.0, %v1020
        %v1022 = vpop.f32.mrb[0].mxu0
        %v1023 = vadd.f32 0.0, %v1022
        %1024 = vmatprep.mubr.bf16.mxu0 0
        %1025 = vmatmul.mubr.bf16.gmra.mrb[0].mxu0 %v851
        %v1026 = vpop.f32.mrb[0].mxu0
        %v1027 = vadd.f32 0.0, %v1026
        %v1028 = vpop.f32.mrb[0].mxu0
        %v1029 = vadd.f32 0.0, %v1028
        %v1030 = vpop.f32.mrb[0].mxu0
        %v1031 = vadd.f32 0.0, %v1030
        %v1032 = vpop.f32.mrb[0].mxu0
        %v1033 = vadd.f32 0.0, %v1032
        %1034 = vmatprep.mubr.bf16.mxu0 0
        %1035 = vmatmul.mubr.bf16.gmra.mrb[0].mxu0 %v854
        %v1036 = vpop.f32.mrb[0].mxu0
        %v1037 = vadd.f32 0.0, %v1036
        %v1038 = vpop.f32.mrb[0].mxu0
        %v1039 = vadd.f32 0.0, %v1038
        %v1040 = vpop.f32.mrb[0].mxu0
        %v1041 = vpop.f32.mrb[0].mxu0
        %1042 = vdwg.mxu0
        %1043 = vmatprep.subr.bf16.mxu0 %v789
        %1044 = vmatpush1.bf16.msra.mxu0 %v788
        %1045 = vmatprep.subr.bf16.mxu0 %v797
        %1046 = vmatpush1.bf16.msra.mxu0 %v796
        %1047 = vmatprep.subr.bf16.mxu0 %v873
        %1048 = vmatpush1.bf16.msra.mxu0 %v870
        %1049 = vmatprep.subr.bf16.mxu0 0
        %1050 = vmatpush1.bf16.msra.mxu0 0
        %1051 = vmatprep.subr.bf16.mxu0 0
        %1052 = vmatpush1.bf16.msra.mxu0 0
        %1053 = vmatprep.subr.bf16.mxu0 0
        %1054 = vmatpush1.bf16.msra.mxu0 0
        %1055 = vmatprep.subr.bf16.mxu0 0
        %1056 = vmatpush1.bf16.msra.mxu0 0
        %1057 = vmatprep.subr.bf16.mxu0 0
        %1058 = vmatpush1.bf16.msra.mxu0 0
        %1059 = vmatprep.subr.bf16.mxu0 0
        %1060 = vmatpush1.bf16.msra.mxu0 0
        %1061 = vmatprep.subr.bf16.mxu0 0
        %1062 = vmatpush1.bf16.msra.mxu0 0
        %1063 = vmatprep.subr.bf16.mxu0 0
        %1064 = vmatpush1.bf16.msra.mxu0 0
        %1065 = vmatprep.subr.bf16.mxu0 0
        %1066 = vmatpush1.bf16.msra.mxu0 0
        %1067 = vmatprep.subr.bf16.mxu0 0
        %1068 = vmatpush1.bf16.msra.mxu0 0
        %1069 = vmatprep.subr.bf16.mxu0 0
        %1070 = vmatpush1.bf16.msra.mxu0 0
        %1071 = vmatprep.subr.bf16.mxu0 0
        %1072 = vmatpush1.bf16.msra.mxu0 0
        %1073 = vmatprep.subr.bf16.mxu0 0
        %1074 = vmatpush1.bf16.msra.mxu0 0
        %1075 = vmatprep.mubr.bf16.mxu0 0
        %1076 = vmatmul.mubr.bf16.gmra.mrb[0].mxu0 %v842
        %v1077 = vpop.f32.mrb[0].mxu0
        %v1078 = vadd.f32 0.0, %v1077
        %v1079 = vpop.f32.mrb[0].mxu0
        %v1080 = vadd.f32 0.0, %v1079
        %v1081 = vpop.f32.mrb[0].mxu0
        %v1082 = vadd.f32 0.0, %v1081
        %v1083 = vpop.f32.mrb[0].mxu0
        %v1084 = vadd.f32 0.0, %v1083
        %1085 = vmatprep.mubr.bf16.mxu0 0
        %1086 = vmatmul.mubr.bf16.gmra.mrb[0].mxu0 %v845
        %v1087 = vpop.f32.mrb[0].mxu0
        %v1088 = vadd.f32 0.0, %v1087
        %v1089 = vpop.f32.mrb[0].mxu0
        %v1090 = vadd.f32 0.0, %v1089
        %v1091 = vpop.f32.mrb[0].mxu0
        %v1092 = vadd.f32 0.0, %v1091
        %v1093 = vpop.f32.mrb[0].mxu0
        %v1094 = vadd.f32 0.0, %v1093
        %1095 = vmatprep.mubr.bf16.mxu0 0
        %1096 = vmatmul.mubr.bf16.gmra.mrb[0].mxu0 %v848
        %v1097 = vpop.f32.mrb[0].mxu0
        %v1098 = vadd.f32 0.0, %v1097
        %v1099 = vpop.f32.mrb[0].mxu0
        %v1100 = vadd.f32 0.0, %v1099
        %v1101 = vpop.f32.mrb[0].mxu0
        %v1102 = vadd.f32 0.0, %v1101
        %v1103 = vpop.f32.mrb[0].mxu0
        %v1104 = vadd.f32 0.0, %v1103
        %1105 = vmatprep.mubr.bf16.mxu0 0
        %1106 = vmatmul.mubr.bf16.gmra.mrb[0].mxu0 %v851
        %v1107 = vpop.f32.mrb[0].mxu0
        %v1108 = vadd.f32 0.0, %v1107
        %v1109 = vpop.f32.mrb[0].mxu0
        %v1110 = vadd.f32 0.0, %v1109
        %v1111 = vpop.f32.mrb[0].mxu0
        %v1112 = vadd.f32 0.0, %v1111
        %v1113 = vpop.f32.mrb[0].mxu0
        %v1114 = vadd.f32 0.0, %v1113
        %1115 = vmatprep.mubr.bf16.mxu0 0
        %1116 = vmatmul.mubr.bf16.gmra.mrb[0].mxu0 %v854
        %v1117 = vpop.f32.mrb[0].mxu0
        %v1118 = vadd.f32 0.0, %v1117
        %v1119 = vpop.f32.mrb[0].mxu0
        %v1120 = vadd.f32 0.0, %v1119
        %v1121 = vpop.f32.mrb[0].mxu0
        %v1122 = vpop.f32.mrb[0].mxu0
        %1123 = vdwg.mxu0
        %1124 = vmatprep.subr.bf16.mxu0 %v791
        %1125 = vmatpush1.bf16.msra.mxu0 %v790
        %1126 = vmatprep.subr.bf16.mxu0 %v799
        %1127 = vmatpush1.bf16.msra.mxu0 %v798
        %1128 = vmatprep.subr.bf16.mxu0 %v879
        %1129 = vmatpush1.bf16.msra.mxu0 %v876
        %1130 = vmatprep.subr.bf16.mxu0 0
        %1131 = vmatpush1.bf16.msra.mxu0 0
        %1132 = vmatprep.subr.bf16.mxu0 0
        %1133 = vmatpush1.bf16.msra.mxu0 0
        %1134 = vmatprep.subr.bf16.mxu0 0
        %1135 = vmatpush1.bf16.msra.mxu0 0
        %1136 = vmatprep.subr.bf16.mxu0 0
        %1137 = vmatpush1.bf16.msra.mxu0 0
        %1138 = vmatprep.subr.bf16.mxu0 0
        %1139 = vmatpush1.bf16.msra.mxu0 0
        %1140 = vmatprep.subr.bf16.mxu0 0
        %1141 = vmatpush1.bf16.msra.mxu0 0
        %1142 = vmatprep.subr.bf16.mxu0 0
        %1143 = vmatpush1.bf16.msra.mxu0 0
        %1144 = vmatprep.subr.bf16.mxu0 0
        %1145 = vmatpush1.bf16.msra.mxu0 0
        %1146 = vmatprep.subr.bf16.mxu0 0
        %1147 = vmatpush1.bf16.msra.mxu0 0
        %1148 = vmatprep.subr.bf16.mxu0 0
        %1149 = vmatpush1.bf16.msra.mxu0 0
        %1150 = vmatprep.subr.bf16.mxu0 0
        %1151 = vmatpush1.bf16.msra.mxu0 0
        %1152 = vmatprep.subr.bf16.mxu0 0
        %1153 = vmatpush1.bf16.msra.mxu0 0
        %1154 = vmatprep.subr.bf16.mxu0 0
        %1155 = vmatpush1.bf16.msra.mxu0 0
        %1156 = vmatprep.mubr.bf16.mxu0 0
        %1157 = vmatmul.mubr.bf16.gmra.mrb[0].mxu0 %v842
        %v1158 = vpop.f32.mrb[0].mxu0
        %v1159 = vadd.f32 0.0, %v1158
        %v1160 = vpop.f32.mrb[0].mxu0
        %v1161 = vadd.f32 0.0, %v1160
        %v1162 = vpop.f32.mrb[0].mxu0
        %v1163 = vadd.f32 0.0, %v1162
        %v1164 = vpop.f32.mrb[0].mxu0
        %v1165 = vadd.f32 0.0, %v1164
        %1166 = vmatprep.mubr.bf16.mxu0 0
        %1167 = vmatmul.mubr.bf16.gmra.mrb[0].mxu0 %v845
        %v1168 = vpop.f32.mrb[0].mxu0
        %v1169 = vadd.f32 0.0, %v1168
        %v1170 = vpop.f32.mrb[0].mxu0
        %v1171 = vadd.f32 0.0, %v1170
        %v1172 = vpop.f32.mrb[0].mxu0
        %v1173 = vadd.f32 0.0, %v1172
        %v1174 = vpop.f32.mrb[0].mxu0
        %v1175 = vadd.f32 0.0, %v1174
        %1176 = vmatprep.mubr.bf16.mxu0 0
        %1177 = vmatmul.mubr.bf16.gmra.mrb[0].mxu0 %v848
        %v1178 = vpop.f32.mrb[0].mxu0
        %v1179 = vadd.f32 0.0, %v1178
        %v1180 = vpop.f32.mrb[0].mxu0
        %v1181 = vadd.f32 0.0, %v1180
        %v1182 = vpop.f32.mrb[0].mxu0
        %v1183 = vadd.f32 0.0, %v1182
        %v1184 = vpop.f32.mrb[0].mxu0
        %v1185 = vadd.f32 0.0, %v1184
        %1186 = vmatprep.mubr.bf16.mxu0 0
        %1187 = vmatmul.mubr.bf16.gmra.mrb[0].mxu0 %v851
        %v1188 = vpop.f32.mrb[0].mxu0
        %v1189 = vadd.f32 0.0, %v1188
        %v1190 = vpop.f32.mrb[0].mxu0
        %v1191 = vadd.f32 0.0, %v1190
        %v1192 = vpop.f32.mrb[0].mxu0
        %v1193 = vadd.f32 0.0, %v1192
        %v1194 = vpop.f32.mrb[0].mxu0
        %v1195 = vadd.f32 0.0, %v1194
        %1196 = vmatprep.mubr.bf16.mxu0 0
        %1197 = vmatmul.mubr.bf16.gmra.mrb[0].mxu0 %v854
        %v1198 = vpop.f32.mrb[0].mxu0
        %v1199 = vadd.f32 0.0, %v1198
        %v1200 = vpop.f32.mrb[0].mxu0
        %v1201 = vadd.f32 0.0, %v1200
        %v1202 = vpop.f32.mrb[0].mxu0
        %v1203 = vpop.f32.mrb[0].mxu0
        %1204 = vdwg.mxu0
        %v1205 = vld [vmem:[%s2] sm:$0xff]
        %v1206 = vld [vmem:[%s2 + $0x8] sm:$0xff]
        %v1207 = vld [vmem:[%s2 + $0x10] sm:$0xff]
        %v1208 = vld [vmem:[%s2 + $0x18] sm:$0xff]
        %v1209 = vld [vmem:[%s2 + $0x20] sm:$0xff]
        %v1210 = vld [vmem:[%s2 + $0x28] sm:$0xff]
        %v1211 = vld [vmem:[%s2 + $0x30] sm:$0xff]
        %v1212 = vld [vmem:[%s2 + $0x38] sm:$0xff]
        %1214 = vset.pattern.permute.xlu0 0
        %1215 = vperm.xlu0 %1214, %v1205
        %v1216 = vpop.permute.xlu0 %1215
        %1219 = vset.pattern.permute.xlu0 0
        %1220 = vperm.xlu0 %1219, %v1206
        %v1221 = vpop.permute.xlu0 %1220
        %1224 = vset.pattern.permute.xlu0 0
        %1225 = vperm.xlu0 %1224, %v1207
        %v1226 = vpop.permute.xlu0 %1225
        %1229 = vset.pattern.permute.xlu0 0
        %1230 = vperm.xlu0 %1229, %v1208
        %v1231 = vpop.permute.xlu0 %1230
        %1234 = vset.pattern.permute.xlu0 0
        %1235 = vperm.xlu0 %1234, %v1209
        %v1236 = vpop.permute.xlu0 %1235
        %1239 = vset.pattern.permute.xlu0 0
        %1240 = vperm.xlu0 %1239, %v1210
        %v1241 = vpop.permute.xlu0 %1240
        %1244 = vset.pattern.permute.xlu0 0
        %1245 = vperm.xlu0 %1244, %v1211
        %v1246 = vpop.permute.xlu0 %1245
        %1249 = vset.pattern.permute.xlu0 0
        %1250 = vperm.xlu0 %1249, %v1212
        %v1251 = vpop.permute.xlu0 %1250
        %v1253 = vadd.f32 %v916, %v1216
        %v1254 = vadd.f32 %v918, %v1216
        %v1255 = vadd.f32 %v997, %v1216
        %v1256 = vadd.f32 %v999, %v1216
        %v1257 = vadd.f32 %v1078, %v1216
        %v1258 = vadd.f32 %v1080, %v1216
        %v1259 = vadd.f32 %v1159, %v1216
        %v1260 = vadd.f32 %v1161, %v1216
        %v1261 = vadd.f32 %v920, %v1221
        %v1262 = vadd.f32 %v922, %v1221
        %v1263 = vadd.f32 %v1001, %v1221
        %v1264 = vadd.f32 %v1003, %v1221
        %v1265 = vadd.f32 %v1082, %v1221
        %v1266 = vadd.f32 %v1084, %v1221
        %v1267 = vadd.f32 %v1163, %v1221
        %v1268 = vadd.f32 %v1165, %v1221
        %v1269 = vadd.f32 %v926, %v1226
        %v1270 = vadd.f32 %v928, %v1226
        %v1271 = vadd.f32 %v1007, %v1226
        %v1272 = vadd.f32 %v1009, %v1226
        %v1273 = vadd.f32 %v1088, %v1226
        %v1274 = vadd.f32 %v1090, %v1226
        %v1275 = vadd.f32 %v1169, %v1226
        %v1276 = vadd.f32 %v1171, %v1226
        %v1277 = vadd.f32 %v930, %v1231
        %v1278 = vadd.f32 %v932, %v1231
        %v1279 = vadd.f32 %v1011, %v1231
        %v1280 = vadd.f32 %v1013, %v1231
        %v1281 = vadd.f32 %v1092, %v1231
        %v1282 = vadd.f32 %v1094, %v1231
        %v1283 = vadd.f32 %v1173, %v1231
        %v1284 = vadd.f32 %v1175, %v1231
        %v1285 = vadd.f32 %v936, %v1236
        %v1286 = vadd.f32 %v938, %v1236
        %v1287 = vadd.f32 %v1017, %v1236
        %v1288 = vadd.f32 %v1019, %v1236
        %v1289 = vadd.f32 %v1098, %v1236
        %v1290 = vadd.f32 %v1100, %v1236
        %v1291 = vadd.f32 %v1179, %v1236
        %v1292 = vadd.f32 %v1181, %v1236
        %v1293 = vadd.f32 %v940, %v1241
        %v1294 = vadd.f32 %v942, %v1241
        %v1295 = vadd.f32 %v1021, %v1241
        %v1296 = vadd.f32 %v1023, %v1241
        %v1297 = vadd.f32 %v1102, %v1241
        %v1298 = vadd.f32 %v1104, %v1241
        %v1299 = vadd.f32 %v1183, %v1241
        %v1300 = vadd.f32 %v1185, %v1241
        %v1301 = vadd.f32 %v946, %v1246
        %v1302 = vadd.f32 %v948, %v1246
        %v1303 = vadd.f32 %v1027, %v1246
        %v1304 = vadd.f32 %v1029, %v1246
        %v1305 = vadd.f32 %v1108, %v1246
        %v1306 = vadd.f32 %v1110, %v1246
        %v1307 = vadd.f32 %v1189, %v1246
        %v1308 = vadd.f32 %v1191, %v1246
        %v1309 = vadd.f32 %v950, %v1251
        %v1310 = vadd.f32 %v952, %v1251
        %v1311 = vadd.f32 %v1031, %v1251
        %v1312 = vadd.f32 %v1033, %v1251
        %v1313 = vadd.f32 %v1112, %v1251
        %v1314 = vadd.f32 %v1114, %v1251
        %v1315 = vadd.f32 %v1193, %v1251
        %v1316 = vadd.f32 %v1195, %v1251
        %v1317 = vmax.f32 %v1253, 0.0
        %v1318 = vmax.f32 %v1254, 0.0
        %v1319 = vmax.f32 %v1255, 0.0
        %v1320 = vmax.f32 %v1256, 0.0
        %v1321 = vmax.f32 %v1257, 0.0
        %v1322 = vmax.f32 %v1258, 0.0
        %v1323 = vmax.f32 %v1259, 0.0
        %v1324 = vmax.f32 %v1260, 0.0
        %v1325 = vmax.f32 %v1261, 0.0
        %v1326 = vmax.f32 %v1262, 0.0
        %v1327 = vmax.f32 %v1263, 0.0
        %v1328 = vmax.f32 %v1264, 0.0
        %v1329 = vmax.f32 %v1265, 0.0
        %v1330 = vmax.f32 %v1266, 0.0
        %v1331 = vmax.f32 %v1267, 0.0
        %v1332 = vmax.f32 %v1268, 0.0
        %v1333 = vmax.f32 %v1269, 0.0
        %v1334 = vmax.f32 %v1270, 0.0
        %v1335 = vmax.f32 %v1271, 0.0
        %v1336 = vmax.f32 %v1272, 0.0
        %v1337 = vmax.f32 %v1273, 0.0
        %v1338 = vmax.f32 %v1274, 0.0
        %v1339 = vmax.f32 %v1275, 0.0
        %v1340 = vmax.f32 %v1276, 0.0
        %v1341 = vmax.f32 %v1277, 0.0
        %v1342 = vmax.f32 %v1278, 0.0
        %v1343 = vmax.f32 %v1279, 0.0
        %v1344 = vmax.f32 %v1280, 0.0
        %v1345 = vmax.f32 %v1281, 0.0
        %v1346 = vmax.f32 %v1282, 0.0
        %v1347 = vmax.f32 %v1283, 0.0
        %v1348 = vmax.f32 %v1284, 0.0
        %v1349 = vmax.f32 %v1285, 0.0
        %v1350 = vmax.f32 %v1286, 0.0
        %v1351 = vmax.f32 %v1287, 0.0
        %v1352 = vmax.f32 %v1288, 0.0
        %v1353 = vmax.f32 %v1289, 0.0
        %v1354 = vmax.f32 %v1290, 0.0
        %v1355 = vmax.f32 %v1291, 0.0
        %v1356 = vmax.f32 %v1292, 0.0
        %v1357 = vmax.f32 %v1293, 0.0
        %v1358 = vmax.f32 %v1294, 0.0
        %v1359 = vmax.f32 %v1295, 0.0
        %v1360 = vmax.f32 %v1296, 0.0
        %v1361 = vmax.f32 %v1297, 0.0
        %v1362 = vmax.f32 %v1298, 0.0
        %v1363 = vmax.f32 %v1299, 0.0
        %v1364 = vmax.f32 %v1300, 0.0
        %v1365 = vmax.f32 %v1301, 0.0
        %v1366 = vmax.f32 %v1302, 0.0
        %v1367 = vmax.f32 %v1303, 0.0
        %v1368 = vmax.f32 %v1304, 0.0
        %v1369 = vmax.f32 %v1305, 0.0
        %v1370 = vmax.f32 %v1306, 0.0
        %v1371 = vmax.f32 %v1307, 0.0
        %v1372 = vmax.f32 %v1308, 0.0
        %v1373 = vmax.f32 %v1309, 0.0
        %v1374 = vmax.f32 %v1310, 0.0
        %v1375 = vmax.f32 %v1311, 0.0
        %v1376 = vmax.f32 %v1312, 0.0
        %v1377 = vmax.f32 %v1313, 0.0
        %v1378 = vmax.f32 %v1314, 0.0
        %v1379 = vmax.f32 %v1315, 0.0
        %v1380 = vmax.f32 %v1316, 0.0
        %v1381 = vld [vmem:[%s3] sm:$0xf]
        %v1382 = vld [vmem:[%s3 + $0x4] sm:$0xf]
        %v1383 = vld [vmem:[%s3 + $0x8] sm:$0xf]
        %v1384 = vld [vmem:[%s3 + $0xc] sm:$0xf]
        %v1385 = vpack.c.bf16 %v1325, %v1317
        %v1386 = vpack.c.bf16 %v1326, %v1318
        %v1387 = vpack.c.bf16 %v1327, %v1319
        %v1388 = vpack.c.bf16 %v1328, %v1320
        %v1389 = vpack.c.bf16 %v1329, %v1321
        %v1390 = vpack.c.bf16 %v1330, %v1322
        %v1391 = vpack.c.bf16 %v1331, %v1323
        %v1392 = vpack.c.bf16 %v1332, %v1324
        %v1393 = vpack.c.bf16 %v1341, %v1333
        %v1394 = vpack.c.bf16 %v1342, %v1334
        %v1395 = vpack.c.bf16 %v1343, %v1335
        %v1396 = vpack.c.bf16 %v1344, %v1336
        %v1397 = vpack.c.bf16 %v1345, %v1337
        %v1398 = vpack.c.bf16 %v1346, %v1338
        %v1399 = vpack.c.bf16 %v1347, %v1339
        %v1400 = vpack.c.bf16 %v1348, %v1340
        %v1401 = vpack.c.bf16 %v1357, %v1349
        %v1402 = vpack.c.bf16 %v1358, %v1350
        %v1403 = vpack.c.bf16 %v1359, %v1351
        %v1404 = vpack.c.bf16 %v1360, %v1352
        %v1405 = vpack.c.bf16 %v1361, %v1353
        %v1406 = vpack.c.bf16 %v1362, %v1354
        %v1407 = vpack.c.bf16 %v1363, %v1355
        %v1408 = vpack.c.bf16 %v1364, %v1356
        %v1409 = vpack.c.bf16 %v1373, %v1365
        %v1410 = vpack.c.bf16 %v1374, %v1366
        %v1411 = vpack.c.bf16 %v1375, %v1367
        %v1412 = vpack.c.bf16 %v1376, %v1368
        %v1413 = vpack.c.bf16 %v1377, %v1369
        %v1414 = vpack.c.bf16 %v1378, %v1370
        %v1415 = vpack.c.bf16 %v1379, %v1371
        %v1416 = vpack.c.bf16 %v1380, %v1372
        %v1417 = vld [vmem:[%s4] sm:$0xff]
        %v1418 = vld [vmem:[%s4 + $0x8] sm:$0xff]
        %v1419 = vld [vmem:[%s4 + $0x10] sm:$0xff]
        %v1420 = vld [vmem:[%s4 + $0x18] sm:$0xff]
        %1422 = vset.pattern.permute.xlu0 0
        %1423 = vperm.xlu0 %1422, %v1417
        %v1424 = vpop.permute.xlu0 %1423
        %1427 = vset.pattern.permute.xlu0 0
        %1428 = vperm.xlu0 %1427, %v1418
        %v1429 = vpop.permute.xlu0 %1428
        %1432 = vset.pattern.permute.xlu0 0
        %1433 = vperm.xlu0 %1432, %v1419
        %v1434 = vpop.permute.xlu0 %1433
        %1437 = vset.pattern.permute.xlu0 0
        %1438 = vperm.xlu0 %1437, %v1420
        %v1439 = vpop.permute.xlu0 %1438
        %v1445 = vunpack.c.l.b16 %v1381
        %v1446 = vunpack.c.l.b16 %v1382
        %v1447 = vunpack.c.l.b16 %v1383
        %v1448 = vunpack.c.l.b16 %v1384
        %v1449 = vpack.c.b16 %v1446, %v1445
        %v1450 = vpack.c.b16 %v1448, %v1447
        %vm1451 = vcmask 523264
        %v1453 = vsel %vm1451, %v1449, 0
        %v1456 = vsel %vm1451, %v1450, 0
        %1458 = vmatprep.subr.bf16.mxu0 %v1386
        %1459 = vmatpush1.bf16.msra.mxu0 %v1385
        %1460 = vmatprep.subr.bf16.mxu0 %v1394
        %1461 = vmatpush1.bf16.msra.mxu0 %v1393
        %1462 = vmatprep.subr.bf16.mxu0 %v1402
        %1463 = vmatpush1.bf16.msra.mxu0 %v1401
        %1464 = vmatprep.subr.bf16.mxu0 %v1410
        %1465 = vmatpush1.bf16.msra.mxu0 %v1409
        %1466 = vmatprep.subr.bf16.mxu0 0
        %1467 = vmatpush1.bf16.msra.mxu0 0
        %1468 = vmatprep.subr.bf16.mxu0 0
        %1469 = vmatpush1.bf16.msra.mxu0 0
        %1470 = vmatprep.subr.bf16.mxu0 0
        %1471 = vmatpush1.bf16.msra.mxu0 0
        %1472 = vmatprep.subr.bf16.mxu0 0
        %1473 = vmatpush1.bf16.msra.mxu0 0
        %1474 = vmatprep.subr.bf16.mxu0 0
        %1475 = vmatpush1.bf16.msra.mxu0 0
        %1476 = vmatprep.subr.bf16.mxu0 0
        %1477 = vmatpush1.bf16.msra.mxu0 0
        %1478 = vmatprep.subr.bf16.mxu0 0
        %1479 = vmatpush1.bf16.msra.mxu0 0
        %1480 = vmatprep.subr.bf16.mxu0 0
        %1481 = vmatpush1.bf16.msra.mxu0 0
        %1482 = vmatprep.subr.bf16.mxu0 0
        %1483 = vmatpush1.bf16.msra.mxu0 0
        %1484 = vmatprep.subr.bf16.mxu0 0
        %1485 = vmatpush1.bf16.msra.mxu0 0
        %1486 = vmatprep.subr.bf16.mxu0 0
        %1487 = vmatpush1.bf16.msra.mxu0 0
        %1488 = vmatprep.subr.bf16.mxu0 0
        %1489 = vmatpush1.bf16.msra.mxu0 0
        %1490 = vmatprep.mubr.bf16.mxu0 0
        %1491 = vmatmul.mubr.bf16.gmra.mrb[0].mxu0 %v1453
        %v1492 = vpop.f32.mrb[0].mxu0
        %v1493 = vadd.f32 %v1424, %v1492
        %v1494 = vpop.f32.mrb[0].mxu0
        %v1495 = vadd.f32 %v1424, %v1494
        %v1496 = vpop.f32.mrb[0].mxu0
        %v1497 = vadd.f32 %v1429, %v1496
        %v1498 = vpop.f32.mrb[0].mxu0
        %v1499 = vadd.f32 %v1429, %v1498
        %1500 = vmatprep.mubr.bf16.mxu0 0
        %1501 = vmatmul.mubr.bf16.gmra.mrb[0].mxu0 %v1456
        %v1502 = vpop.f32.mrb[0].mxu0
        %v1503 = vadd.f32 %v1434, %v1502
        %v1504 = vpop.f32.mrb[0].mxu0
        %v1505 = vadd.f32 %v1434, %v1504
        %v1506 = vpop.f32.mrb[0].mxu0
        %v1507 = vadd.f32 %v1439, %v1506
        %v1508 = vpop.f32.mrb[0].mxu0
        %v1509 = vadd.f32 %v1439, %v1508
        %1510 = vdwg.mxu0
        %1511 = vmatprep.subr.bf16.mxu0 %v1388
        %1512 = vmatpush1.bf16.msra.mxu0 %v1387
        %1513 = vmatprep.subr.bf16.mxu0 %v1396
        %1514 = vmatpush1.bf16.msra.mxu0 %v1395
        %1515 = vmatprep.subr.bf16.mxu0 %v1404
        %1516 = vmatpush1.bf16.msra.mxu0 %v1403
        %1517 = vmatprep.subr.bf16.mxu0 %v1412
        %1518 = vmatpush1.bf16.msra.mxu0 %v1411
        %1519 = vmatprep.subr.bf16.mxu0 0
        %1520 = vmatpush1.bf16.msra.mxu0 0
        %1521 = vmatprep.subr.bf16.mxu0 0
        %1522 = vmatpush1.bf16.msra.mxu0 0
        %1523 = vmatprep.subr.bf16.mxu0 0
        %1524 = vmatpush1.bf16.msra.mxu0 0
        %1525 = vmatprep.subr.bf16.mxu0 0
        %1526 = vmatpush1.bf16.msra.mxu0 0
        %1527 = vmatprep.subr.bf16.mxu0 0
        %1528 = vmatpush1.bf16.msra.mxu0 0
        %1529 = vmatprep.subr.bf16.mxu0 0
        %1530 = vmatpush1.bf16.msra.mxu0 0
        %1531 = vmatprep.subr.bf16.mxu0 0
        %1532 = vmatpush1.bf16.msra.mxu0 0
        %1533 = vmatprep.subr.bf16.mxu0 0
        %1534 = vmatpush1.bf16.msra.mxu0 0
        %1535 = vmatprep.subr.bf16.mxu0 0
        %1536 = vmatpush1.bf16.msra.mxu0 0
        %1537 = vmatprep.subr.bf16.mxu0 0
        %1538 = vmatpush1.bf16.msra.mxu0 0
        %1539 = vmatprep.subr.bf16.mxu0 0
        %1540 = vmatpush1.bf16.msra.mxu0 0
        %1541 = vmatprep.subr.bf16.mxu0 0
        %1542 = vmatpush1.bf16.msra.mxu0 0
        %1543 = vmatprep.mubr.bf16.mxu0 0
        %1544 = vmatmul.mubr.bf16.gmra.mrb[0].mxu0 %v1453
        %v1545 = vpop.f32.mrb[0].mxu0
        %v1546 = vadd.f32 %v1424, %v1545
        %v1547 = vpop.f32.mrb[0].mxu0
        %v1548 = vadd.f32 %v1424, %v1547
        %v1549 = vpop.f32.mrb[0].mxu0
        %v1550 = vadd.f32 %v1429, %v1549
        %v1551 = vpop.f32.mrb[0].mxu0
        %v1552 = vadd.f32 %v1429, %v1551
        %1553 = vmatprep.mubr.bf16.mxu0 0
        %1554 = vmatmul.mubr.bf16.gmra.mrb[0].mxu0 %v1456
        %v1555 = vpop.f32.mrb[0].mxu0
        %v1556 = vadd.f32 %v1434, %v1555
        %v1557 = vpop.f32.mrb[0].mxu0
        %v1558 = vadd.f32 %v1434, %v1557
        %v1559 = vpop.f32.mrb[0].mxu0
        %v1560 = vadd.f32 %v1439, %v1559
        %v1561 = vpop.f32.mrb[0].mxu0
        %v1562 = vadd.f32 %v1439, %v1561
        %1563 = vdwg.mxu0
        %1564 = vmatprep.subr.bf16.mxu0 %v1390
        %1565 = vmatpush1.bf16.msra.mxu0 %v1389
        %1566 = vmatprep.subr.bf16.mxu0 %v1398
        %1567 = vmatpush1.bf16.msra.mxu0 %v1397
        %1568 = vmatprep.subr.bf16.mxu0 %v1406
        %1569 = vmatpush1.bf16.msra.mxu0 %v1405
        %1570 = vmatprep.subr.bf16.mxu0 %v1414
        %1571 = vmatpush1.bf16.msra.mxu0 %v1413
        %1572 = vmatprep.subr.bf16.mxu0 0
        %1573 = vmatpush1.bf16.msra.mxu0 0
        %1574 = vmatprep.subr.bf16.mxu0 0
        %1575 = vmatpush1.bf16.msra.mxu0 0
        %1576 = vmatprep.subr.bf16.mxu0 0
        %1577 = vmatpush1.bf16.msra.mxu0 0
        %1578 = vmatprep.subr.bf16.mxu0 0
        %1579 = vmatpush1.bf16.msra.mxu0 0
        %1580 = vmatprep.subr.bf16.mxu0 0
        %1581 = vmatpush1.bf16.msra.mxu0 0
        %1582 = vmatprep.subr.bf16.mxu0 0
        %1583 = vmatpush1.bf16.msra.mxu0 0
        %1584 = vmatprep.subr.bf16.mxu0 0
        %1585 = vmatpush1.bf16.msra.mxu0 0
        %1586 = vmatprep.subr.bf16.mxu0 0
        %1587 = vmatpush1.bf16.msra.mxu0 0
        %1588 = vmatprep.subr.bf16.mxu0 0
        %1589 = vmatpush1.bf16.msra.mxu0 0
        %1590 = vmatprep.subr.bf16.mxu0 0
        %1591 = vmatpush1.bf16.msra.mxu0 0
        %1592 = vmatprep.subr.bf16.mxu0 0
        %1593 = vmatpush1.bf16.msra.mxu0 0
        %1594 = vmatprep.subr.bf16.mxu0 0
        %1595 = vmatpush1.bf16.msra.mxu0 0
        %1596 = vmatprep.mubr.bf16.mxu0 0
        %1597 = vmatmul.mubr.bf16.gmra.mrb[0].mxu0 %v1453
        %v1598 = vpop.f32.mrb[0].mxu0
        %v1599 = vadd.f32 %v1424, %v1598
        %v1600 = vpop.f32.mrb[0].mxu0
        %v1601 = vadd.f32 %v1424, %v1600
        %v1602 = vpop.f32.mrb[0].mxu0
        %v1603 = vadd.f32 %v1429, %v1602
        %v1604 = vpop.f32.mrb[0].mxu0
        %v1605 = vadd.f32 %v1429, %v1604
        %1606 = vmatprep.mubr.bf16.mxu0 0
        %1607 = vmatmul.mubr.bf16.gmra.mrb[0].mxu0 %v1456
        %v1608 = vpop.f32.mrb[0].mxu0
        %v1609 = vadd.f32 %v1434, %v1608
        %v1610 = vpop.f32.mrb[0].mxu0
        %v1611 = vadd.f32 %v1434, %v1610
        %v1612 = vpop.f32.mrb[0].mxu0
        %v1613 = vadd.f32 %v1439, %v1612
        %v1614 = vpop.f32.mrb[0].mxu0
        %v1615 = vadd.f32 %v1439, %v1614
        %1616 = vdwg.mxu0
        %1617 = vmatprep.subr.bf16.mxu0 %v1392
        %1618 = vmatpush1.bf16.msra.mxu0 %v1391
        %1619 = vmatprep.subr.bf16.mxu0 %v1400
        %1620 = vmatpush1.bf16.msra.mxu0 %v1399
        %1621 = vmatprep.subr.bf16.mxu0 %v1408
        %1622 = vmatpush1.bf16.msra.mxu0 %v1407
        %1623 = vmatprep.subr.bf16.mxu0 %v1416
        %1624 = vmatpush1.bf16.msra.mxu0 %v1415
        %1625 = vmatprep.subr.bf16.mxu0 0
        %1626 = vmatpush1.bf16.msra.mxu0 0
        %1627 = vmatprep.subr.bf16.mxu0 0
        %1628 = vmatpush1.bf16.msra.mxu0 0
        %1629 = vmatprep.subr.bf16.mxu0 0
        %1630 = vmatpush1.bf16.msra.mxu0 0
        %1631 = vmatprep.subr.bf16.mxu0 0
        %1632 = vmatpush1.bf16.msra.mxu0 0
        %1633 = vmatprep.subr.bf16.mxu0 0
        %1634 = vmatpush1.bf16.msra.mxu0 0
        %1635 = vmatprep.subr.bf16.mxu0 0
        %1636 = vmatpush1.bf16.msra.mxu0 0
        %1637 = vmatprep.subr.bf16.mxu0 0
        %1638 = vmatpush1.bf16.msra.mxu0 0
        %1639 = vmatprep.subr.bf16.mxu0 0
        %1640 = vmatpush1.bf16.msra.mxu0 0
        %1641 = vmatprep.subr.bf16.mxu0 0
        %1642 = vmatpush1.bf16.msra.mxu0 0
        %1643 = vmatprep.subr.bf16.mxu0 0
        %1644 = vmatpush1.bf16.msra.mxu0 0
        %1645 = vmatprep.subr.bf16.mxu0 0
        %1646 = vmatpush1.bf16.msra.mxu0 0
        %1647 = vmatprep.subr.bf16.mxu0 0
        %1648 = vmatpush1.bf16.msra.mxu0 0
        %1649 = vmatprep.mubr.bf16.mxu0 0
        %1650 = vmatmul.mubr.bf16.gmra.mrb[0].mxu0 %v1453
        %v1651 = vpop.f32.mrb[0].mxu0
        %v1652 = vadd.f32 %v1424, %v1651
        %v1653 = vpop.f32.mrb[0].mxu0
        %v1654 = vadd.f32 %v1424, %v1653
        %v1655 = vpop.f32.mrb[0].mxu0
        %v1656 = vadd.f32 %v1429, %v1655
        %v1657 = vpop.f32.mrb[0].mxu0
        %v1658 = vadd.f32 %v1429, %v1657
        %1659 = vmatprep.mubr.bf16.mxu0 0
        %1660 = vmatmul.mubr.bf16.gmra.mrb[0].mxu0 %v1456
        %v1661 = vpop.f32.mrb[0].mxu0
        %v1662 = vadd.f32 %v1434, %v1661
        %v1663 = vpop.f32.mrb[0].mxu0
        %v1664 = vadd.f32 %v1434, %v1663
        %v1665 = vpop.f32.mrb[0].mxu0
        %v1666 = vadd.f32 %v1439, %v1665
        %v1667 = vpop.f32.mrb[0].mxu0
        %v1668 = vadd.f32 %v1439, %v1667
        %1669 = vdwg.mxu0
        %v1670 = vmax.f32 %v1493, 0.0
        %v1671 = vmax.f32 %v1495, 0.0
        %v1672 = vmax.f32 %v1546, 0.0
        %v1673 = vmax.f32 %v1548, 0.0
        %v1674 = vmax.f32 %v1599, 0.0
        %v1675 = vmax.f32 %v1601, 0.0
        %v1676 = vmax.f32 %v1652, 0.0
        %v1677 = vmax.f32 %v1654, 0.0
        %v1678 = vmax.f32 %v1497, 0.0
        %v1679 = vmax.f32 %v1499, 0.0
        %v1680 = vmax.f32 %v1550, 0.0
        %v1681 = vmax.f32 %v1552, 0.0
        %v1682 = vmax.f32 %v1603, 0.0
        %v1683 = vmax.f32 %v1605, 0.0
        %v1684 = vmax.f32 %v1656, 0.0
        %v1685 = vmax.f32 %v1658, 0.0
        %v1686 = vmax.f32 %v1503, 0.0
        %v1687 = vmax.f32 %v1505, 0.0
        %v1688 = vmax.f32 %v1556, 0.0
        %v1689 = vmax.f32 %v1558, 0.0
        %v1690 = vmax.f32 %v1609, 0.0
        %v1691 = vmax.f32 %v1611, 0.0
        %v1692 = vmax.f32 %v1662, 0.0
        %v1693 = vmax.f32 %v1664, 0.0
        %v1694 = vmax.f32 %v1507, 0.0
        %v1695 = vmax.f32 %v1509, 0.0
        %v1696 = vmax.f32 %v1560, 0.0
        %v1697 = vmax.f32 %v1562, 0.0
        %v1698 = vmax.f32 %v1613, 0.0
        %v1699 = vmax.f32 %v1615, 0.0
        %v1700 = vmax.f32 %v1666, 0.0
        %v1701 = vmax.f32 %v1668, 0.0
        %v1702 = vld [vmem:[%s5] sm:$0x1]
        %v1703 = vpack.c.bf16 %v1678, %v1670
        %v1704 = vpack.c.bf16 %v1679, %v1671
        %v1705 = vpack.c.bf16 %v1680, %v1672
        %v1706 = vpack.c.bf16 %v1681, %v1673
        %v1707 = vpack.c.bf16 %v1682, %v1674
        %v1708 = vpack.c.bf16 %v1683, %v1675
        %v1709 = vpack.c.bf16 %v1684, %v1676
        %v1710 = vpack.c.bf16 %v1685, %v1677
        %v1711 = vpack.c.bf16 %v1694, %v1686
        %v1712 = vpack.c.bf16 %v1695, %v1687
        %v1713 = vpack.c.bf16 %v1696, %v1688
        %v1714 = vpack.c.bf16 %v1697, %v1689
        %v1715 = vpack.c.bf16 %v1698, %v1690
        %v1716 = vpack.c.bf16 %v1699, %v1691
        %v1717 = vpack.c.bf16 %v1700, %v1692
        %v1718 = vpack.c.bf16 %v1701, %v1693
        %vm1719 = vcmask 261120
        %v1721 = vsel %vm1719, %v1702, 0
        %1723 = vmatprep.subr.bf16.mxu0 %v1704
        %1724 = vmatpush1.bf16.msra.mxu0 %v1703
        %1725 = vmatprep.subr.bf16.mxu0 %v1712
        %1726 = vmatpush1.bf16.msra.mxu0 %v1711
        %1727 = vmatprep.subr.bf16.mxu0 0
        %1728 = vmatpush1.bf16.msra.mxu0 0
        %1729 = vmatprep.subr.bf16.mxu0 0
        %1730 = vmatpush1.bf16.msra.mxu0 0
        %1731 = vmatprep.subr.bf16.mxu0 0
        %1732 = vmatpush1.bf16.msra.mxu0 0
        %1733 = vmatprep.subr.bf16.mxu0 0
        %1734 = vmatpush1.bf16.msra.mxu0 0
        %1735 = vmatprep.subr.bf16.mxu0 0
        %1736 = vmatpush1.bf16.msra.mxu0 0
        %1737 = vmatprep.subr.bf16.mxu0 0
        %1738 = vmatpush1.bf16.msra.mxu0 0
        %1739 = vmatprep.subr.bf16.mxu0 0
        %1740 = vmatpush1.bf16.msra.mxu0 0
        %1741 = vmatprep.subr.bf16.mxu0 0
        %1742 = vmatpush1.bf16.msra.mxu0 0
        %1743 = vmatprep.subr.bf16.mxu0 0
        %1744 = vmatpush1.bf16.msra.mxu0 0
        %1745 = vmatprep.subr.bf16.mxu0 0
        %1746 = vmatpush1.bf16.msra.mxu0 0
        %1747 = vmatprep.subr.bf16.mxu0 0
        %1748 = vmatpush1.bf16.msra.mxu0 0
        %1749 = vmatprep.subr.bf16.mxu0 0
        %1750 = vmatpush1.bf16.msra.mxu0 0
        %1751 = vmatprep.subr.bf16.mxu0 0
        %1752 = vmatpush1.bf16.msra.mxu0 0
        %1753 = vmatprep.subr.bf16.mxu0 0
        %1754 = vmatpush1.bf16.msra.mxu0 0
        %1755 = vmatprep.mubr.bf16.mxu0 0
        %1756 = vmatmul.mubr.bf16.gmra.mrb[0].mxu0 %v1721
        %v1757 = vpop.f32.mrb[0].mxu0
        %v1758 = vadd.f32 %v956, %v1757
        %v1759 = vpop.f32.mrb[0].mxu0
        %v1760 = vadd.f32 %v958, %v1759
        %v1761 = vpop.f32.mrb[0].mxu0
        %v1762 = vpop.f32.mrb[0].mxu0
        %1763 = vdwg.mxu0
        %1764 = vmatprep.subr.bf16.mxu0 %v1706
        %1765 = vmatpush1.bf16.msra.mxu0 %v1705
        %1766 = vmatprep.subr.bf16.mxu0 %v1714
        %1767 = vmatpush1.bf16.msra.mxu0 %v1713
        %1768 = vmatprep.subr.bf16.mxu0 0
        %1769 = vmatpush1.bf16.msra.mxu0 0
        %1770 = vmatprep.subr.bf16.mxu0 0
        %1771 = vmatpush1.bf16.msra.mxu0 0
        %1772 = vmatprep.subr.bf16.mxu0 0
        %1773 = vmatpush1.bf16.msra.mxu0 0
        %1774 = vmatprep.subr.bf16.mxu0 0
        %1775 = vmatpush1.bf16.msra.mxu0 0
        %1776 = vmatprep.subr.bf16.mxu0 0
        %1777 = vmatpush1.bf16.msra.mxu0 0
        %1778 = vmatprep.subr.bf16.mxu0 0
        %1779 = vmatpush1.bf16.msra.mxu0 0
        %1780 = vmatprep.subr.bf16.mxu0 0
        %1781 = vmatpush1.bf16.msra.mxu0 0
        %1782 = vmatprep.subr.bf16.mxu0 0
        %1783 = vmatpush1.bf16.msra.mxu0 0
        %1784 = vmatprep.subr.bf16.mxu0 0
        %1785 = vmatpush1.bf16.msra.mxu0 0
        %1786 = vmatprep.subr.bf16.mxu0 0
        %1787 = vmatpush1.bf16.msra.mxu0 0
        %1788 = vmatprep.subr.bf16.mxu0 0
        %1789 = vmatpush1.bf16.msra.mxu0 0
        %1790 = vmatprep.subr.bf16.mxu0 0
        %1791 = vmatpush1.bf16.msra.mxu0 0
        %1792 = vmatprep.subr.bf16.mxu0 0
        %1793 = vmatpush1.bf16.msra.mxu0 0
        %1794 = vmatprep.subr.bf16.mxu0 0
        %1795 = vmatpush1.bf16.msra.mxu0 0
        %1796 = vmatprep.mubr.bf16.mxu0 0
        %1797 = vmatmul.mubr.bf16.gmra.mrb[0].mxu0 %v1721
        %v1798 = vpop.f32.mrb[0].mxu0
        %v1799 = vadd.f32 %v1037, %v1798
        %v1800 = vpop.f32.mrb[0].mxu0
        %v1801 = vadd.f32 %v1039, %v1800
        %v1802 = vpop.f32.mrb[0].mxu0
        %v1803 = vpop.f32.mrb[0].mxu0
        %1804 = vdwg.mxu0
        %1805 = vmatprep.subr.bf16.mxu0 %v1708
        %1806 = vmatpush1.bf16.msra.mxu0 %v1707
        %1807 = vmatprep.subr.bf16.mxu0 %v1716
        %1808 = vmatpush1.bf16.msra.mxu0 %v1715
        %1809 = vmatprep.subr.bf16.mxu0 0
        %1810 = vmatpush1.bf16.msra.mxu0 0
        %1811 = vmatprep.subr.bf16.mxu0 0
        %1812 = vmatpush1.bf16.msra.mxu0 0
        %1813 = vmatprep.subr.bf16.mxu0 0
        %1814 = vmatpush1.bf16.msra.mxu0 0
        %1815 = vmatprep.subr.bf16.mxu0 0
        %1816 = vmatpush1.bf16.msra.mxu0 0
        %1817 = vmatprep.subr.bf16.mxu0 0
        %1818 = vmatpush1.bf16.msra.mxu0 0
        %1819 = vmatprep.subr.bf16.mxu0 0
        %1820 = vmatpush1.bf16.msra.mxu0 0
        %1821 = vmatprep.subr.bf16.mxu0 0
        %1822 = vmatpush1.bf16.msra.mxu0 0
        %1823 = vmatprep.subr.bf16.mxu0 0
        %1824 = vmatpush1.bf16.msra.mxu0 0
        %1825 = vmatprep.subr.bf16.mxu0 0
        %1826 = vmatpush1.bf16.msra.mxu0 0
        %1827 = vmatprep.subr.bf16.mxu0 0
        %1828 = vmatpush1.bf16.msra.mxu0 0
        %1829 = vmatprep.subr.bf16.mxu0 0
        %1830 = vmatpush1.bf16.msra.mxu0 0
        %1831 = vmatprep.subr.bf16.mxu0 0
        %1832 = vmatpush1.bf16.msra.mxu0 0
        %1833 = vmatprep.subr.bf16.mxu0 0
        %1834 = vmatpush1.bf16.msra.mxu0 0
        %1835 = vmatprep.subr.bf16.mxu0 0
        %1836 = vmatpush1.bf16.msra.mxu0 0
        %1837 = vmatprep.mubr.bf16.mxu0 0
        %1838 = vmatmul.mubr.bf16.gmra.mrb[0].mxu0 %v1721
        %v1839 = vpop.f32.mrb[0].mxu0
        %v1840 = vadd.f32 %v1118, %v1839
        %v1841 = vpop.f32.mrb[0].mxu0
        %v1842 = vadd.f32 %v1120, %v1841
        %v1843 = vpop.f32.mrb[0].mxu0
        %v1844 = vpop.f32.mrb[0].mxu0
        %1845 = vdwg.mxu0
        %1846 = vmatprep.subr.bf16.mxu0 %v1710
        %1847 = vmatpush1.bf16.msra.mxu0 %v1709
        %1848 = vmatprep.subr.bf16.mxu0 %v1718
        %1849 = vmatpush1.bf16.msra.mxu0 %v1717
        %1850 = vmatprep.subr.bf16.mxu0 0
        %1851 = vmatpush1.bf16.msra.mxu0 0
        %1852 = vmatprep.subr.bf16.mxu0 0
        %1853 = vmatpush1.bf16.msra.mxu0 0
        %1854 = vmatprep.subr.bf16.mxu0 0
        %1855 = vmatpush1.bf16.msra.mxu0 0
        %1856 = vmatprep.subr.bf16.mxu0 0
        %1857 = vmatpush1.bf16.msra.mxu0 0
        %1858 = vmatprep.subr.bf16.mxu0 0
        %1859 = vmatpush1.bf16.msra.mxu0 0
        %1860 = vmatprep.subr.bf16.mxu0 0
        %1861 = vmatpush1.bf16.msra.mxu0 0
        %1862 = vmatprep.subr.bf16.mxu0 0
        %1863 = vmatpush1.bf16.msra.mxu0 0
        %1864 = vmatprep.subr.bf16.mxu0 0
        %1865 = vmatpush1.bf16.msra.mxu0 0
        %1866 = vmatprep.subr.bf16.mxu0 0
        %1867 = vmatpush1.bf16.msra.mxu0 0
        %1868 = vmatprep.subr.bf16.mxu0 0
        %1869 = vmatpush1.bf16.msra.mxu0 0
        %1870 = vmatprep.subr.bf16.mxu0 0
        %1871 = vmatpush1.bf16.msra.mxu0 0
        %1872 = vmatprep.subr.bf16.mxu0 0
        %1873 = vmatpush1.bf16.msra.mxu0 0
        %1874 = vmatprep.subr.bf16.mxu0 0
        %1875 = vmatpush1.bf16.msra.mxu0 0
        %1876 = vmatprep.subr.bf16.mxu0 0
        %1877 = vmatpush1.bf16.msra.mxu0 0
        %1878 = vmatprep.mubr.bf16.mxu0 0
        %1879 = vmatmul.mubr.bf16.gmra.mrb[0].mxu0 %v1721
        %v1880 = vpop.f32.mrb[0].mxu0
        %v1881 = vadd.f32 %v1199, %v1880
        %v1882 = vpop.f32.mrb[0].mxu0
        %v1883 = vadd.f32 %v1201, %v1882
        %v1884 = vpop.f32.mrb[0].mxu0
        %v1885 = vpop.f32.mrb[0].mxu0
        %1886 = vdwg.mxu0
        %s1887 = sld [smem:[#allocation2]]
        %v1888 = vstv %s1887
        %v1889 = vadd.f32 %v1758, %v1888
        %v1890 = vadd.f32 %v1760, %v1888
        %v1891 = vadd.f32 %v1799, %v1888
        %v1892 = vadd.f32 %v1801, %v1888
        %v1893 = vadd.f32 %v1840, %v1888
        %v1894 = vadd.f32 %v1842, %v1888
        %v1895 = vadd.f32 %v1881, %v1888
        %v1896 = vadd.f32 %v1883, %v1888
        %v1897 = vxor.u32 %v1889, 2147483648
        %v1898 = vxor.u32 %v1890, 2147483648
        %v1899 = vxor.u32 %v1891, 2147483648
        %v1900 = vxor.u32 %v1892, 2147483648
        %v1901 = vxor.u32 %v1893, 2147483648
        %v1902 = vxor.u32 %v1894, 2147483648
        %v1903 = vxor.u32 %v1895, 2147483648
        %v1904 = vxor.u32 %v1896, 2147483648
        %v1905 = vmul.f32 %v1897, 1.442695
        %v1906 = vpow.pop %v1905
        %v1907 = vmul.f32 %v1898, 1.442695
        %v1908 = vpow.pop %v1907
        %v1909 = vmul.f32 %v1899, 1.442695
        %v1910 = vpow.pop %v1909
        %v1911 = vmul.f32 %v1900, 1.442695
        %v1912 = vpow.pop %v1911
        %v1913 = vmul.f32 %v1901, 1.442695
        %v1914 = vpow.pop %v1913
        %v1915 = vmul.f32 %v1902, 1.442695
        %v1916 = vpow.pop %v1915
        %v1917 = vmul.f32 %v1903, 1.442695
        %v1918 = vpow.pop %v1917
        %v1919 = vmul.f32 %v1904, 1.442695
        %v1920 = vpow.pop %v1919
        %v1921 = vadd.f32 %v1906, 1.0
        %v1922 = vadd.f32 %v1908, 1.0
        %v1923 = vadd.f32 %v1910, 1.0
        %v1924 = vadd.f32 %v1912, 1.0
        %v1925 = vadd.f32 %v1914, 1.0
        %v1926 = vadd.f32 %v1916, 1.0
        %v1927 = vadd.f32 %v1918, 1.0
        %v1928 = vadd.f32 %v1920, 1.0
        %v1929 = vrcp.pop %v1921
        %v1930 = vmul.f32 1.0, %v1929
        %v1931 = vrcp.pop %v1922
        %v1932 = vmul.f32 1.0, %v1931
        %v1933 = vrcp.pop %v1923
        %v1934 = vmul.f32 1.0, %v1933
        %v1935 = vrcp.pop %v1924
        %v1936 = vmul.f32 1.0, %v1935
        %v1937 = vrcp.pop %v1925
        %v1938 = vmul.f32 1.0, %v1937
        %v1939 = vrcp.pop %v1926
        %v1940 = vmul.f32 1.0, %v1939
        %v1941 = vrcp.pop %v1927
        %v1942 = vmul.f32 1.0, %v1941
        %v1943 = vrcp.pop %v1928
        %v1944 = vmul.f32 1.0, %v1943
        %vm1945 = vcmp.ge.s32.totalorder %v282, 0
        %vm1946 = vcmp.ge.s32.totalorder %v283, 0
        %vm1947 = vcmp.ge.s32.totalorder %v284, 0
        %vm1948 = vcmp.ge.s32.totalorder %v285, 0
        %vm1949 = vcmp.ge.s32.totalorder %v286, 0
        %vm1950 = vcmp.ge.s32.totalorder %v287, 0
        %vm1951 = vcmp.ge.s32.totalorder %v288, 0
        %vm1952 = vcmp.ge.s32.totalorder %v289, 0
        %vm1953 = vcmp.lt.s32.totalorder %v282, 3
        %vm1954 = vcmp.lt.s32.totalorder %v283, 3
        %vm1955 = vcmp.lt.s32.totalorder %v284, 3
        %vm1956 = vcmp.lt.s32.totalorder %v285, 3
        %vm1957 = vcmp.lt.s32.totalorder %v286, 3
        %vm1958 = vcmp.lt.s32.totalorder %v287, 3
        %vm1959 = vcmp.lt.s32.totalorder %v288, 3
        %vm1960 = vcmp.lt.s32.totalorder %v289, 3
        %vm1961 = vmand %vm1945, %vm1953
        %vm1962 = vmand %vm1946, %vm1954
        %vm1963 = vmand %vm1947, %vm1955
        %vm1964 = vmand %vm1948, %vm1956
        %vm1965 = vmand %vm1949, %vm1957
        %vm1966 = vmand %vm1950, %vm1958
        %vm1967 = vmand %vm1951, %vm1959
        %vm1968 = vmand %vm1952, %vm1960
        %v1977 = vrot.slane %v1930, 4
        %v1978 = vrot.slane %v1932, 4
        %v1979 = vrot.slane %v1934, 4
        %v1980 = vrot.slane %v1936, 4
        %v1981 = vrot.slane %v1938, 4
        %v1982 = vrot.slane %v1940, 4
        %v1983 = vrot.slane %v1942, 4
        %v1984 = vrot.slane %v1944, 4
        %v1993 = vsel %vm1961, %v1977, 0.0
        %v1994 = vsel %vm1962, %v1978, 0.0
        %v1995 = vsel %vm1963, %v1979, 0.0
        %v1996 = vsel %vm1964, %v1980, 0.0
        %v1997 = vsel %vm1965, %v1981, 0.0
        %v1998 = vsel %vm1966, %v1982, 0.0
        %v1999 = vsel %vm1967, %v1983, 0.0
        %v2000 = vsel %vm1968, %v1984, 0.0
        %v2001 = vlaneseq
        %v2002 = vshrl.u32 %v2001, 7
        %v2003 = vsub.s32 4, %v2002
        %v2004 = vrot.slane %v1993, %v2003
        %v2005 = vlaneseq
        %v2006 = vshrl.u32 %v2005, 7
        %v2007 = vsub.s32 4, %v2006
        %v2008 = vrot.slane %v1994, %v2007
        %v2009 = vlaneseq
        %v2010 = vshrl.u32 %v2009, 7
        %v2011 = vsub.s32 4, %v2010
        %v2012 = vrot.slane %v1995, %v2011
        %v2013 = vlaneseq
        %v2014 = vshrl.u32 %v2013, 7
        %v2015 = vsub.s32 4, %v2014
        %v2016 = vrot.slane %v1996, %v2015
        %v2017 = vlaneseq
        %v2018 = vshrl.u32 %v2017, 7
        %v2019 = vsub.s32 4, %v2018
        %v2020 = vrot.slane %v1997, %v2019
        %v2021 = vlaneseq
        %v2022 = vshrl.u32 %v2021, 7
        %v2023 = vsub.s32 4, %v2022
        %v2024 = vrot.slane %v1998, %v2023
        %v2025 = vlaneseq
        %v2026 = vshrl.u32 %v2025, 7
        %v2027 = vsub.s32 4, %v2026
        %v2028 = vrot.slane %v1999, %v2027
        %v2029 = vlaneseq
        %v2030 = vshrl.u32 %v2029, 7
        %v2031 = vsub.s32 4, %v2030
        %v2032 = vrot.slane %v2000, %v2031
        %2033 = vst [vmem:[%s273] sm:$0xff] %v2004
        %2034 = vst [vmem:[%s273 + $0x8] sm:$0xff] %v2008
        %2035 = vst [vmem:[%s273 + $0x10] sm:$0xff] %v2012
        %2036 = vst [vmem:[%s273 + $0x18] sm:$0xff] %v2016
        %2037 = vst [vmem:[%s273 + $0x20] sm:$0xff] %v2020
        %2038 = vst [vmem:[%s273 + $0x28] sm:$0xff] %v2024
        %2039 = vst [vmem:[%s273 + $0x30] sm:$0xff] %v2028
        %2040 = vst [vmem:[%s273 + $0x38] sm:$0xff] %v2032
        %s2041 = sand.u32 %s182, 1
        %s2042 = scalar_lea.sflag [#allocation4], %s2041
        %s2043 = sand.u32 %s182, 1
        %s2044 = smul.addr %s2043, 64
        %s2045 = scalar_lea.vmem [#allocation3], %s2044
        // Predicated region
        $region49: #{tpu_custom_call.1} parent=47 // pred_check
          %p2046 = pneg %p192
        $region50: #{tpu_custom_call.1} parent=47 // pred_check_branch
          %2048 = sbr.rel (%p2046) target = $region52
        $region51: #{tpu_custom_call.1} parent=47 // pred_region
          %s2049 = smul.u32 8, %s22
          %s2051 = ssub.s32 1024, 1024
          %2052 = vsyncadd %s2042, %s2051
          %s2053 = smul.addr %s2049, 128
          %s2054 = scalar_lea.hbm %s7, %s2053
          %s2056 = sshll.u32 %s2045, 4
          %s2057 = int_to_ptr.vmem [resolvable:$true] %s2056
          %2059 = dma.vmem_to_hbm [thread:$0]  %s2057, 1024, %s2054, %s2042
        $region52: #{tpu_custom_call.1} parent=47 // pred_fallthru
          _
      $region48: #{tpu_custom_call.1} parent=5 // pred_fallthru
        _
      %p2060 = scmp.le.s32.totalorder 2, %s17
      // Predicated region
      $region53: #{tpu_custom_call.1} parent=5 // pred_check
        %p2061 = pneg %p2060
      $region54: #{tpu_custom_call.1} parent=5 // pred_check_branch
        %2063 = sbr.rel (%p2061) target = $region56
      $region55: #{tpu_custom_call.1} parent=5 // pred_region
        %s2064 = ssub.s32 %s17, 2
        // Predicated region
        $region57: #{tpu_custom_call.1} parent=55 // pred_check
          %p2065 = pneg %p198
        $region58: #{tpu_custom_call.1} parent=55 // pred_check_branch
          %2067 = sbr.rel (%p2065) target = $region60
        $region59: #{tpu_custom_call.1} parent=55 // pred_region
          %s2068 = sand.u32 %s183, 1
          %s2069 = scalar_lea.sflag [#allocation4], %s2068
          %s2070 = sand.u32 %s183, 1
          %s2071 = smul.addr %s2070, 64
          %s2072 = scalar_lea.vmem [#allocation3], %s2071
          %2073 = dma.done %s2069, 1024
        $region60: #{tpu_custom_call.1} parent=55 // pred_fallthru
          _
      $region56: #{tpu_custom_call.1} parent=5 // pred_fallthru
        _
    $region6: #{tpu_custom_call.1} parent=1 // loop_footer
      %s21 = sadd.s32 1, %s17
    $region7: #{tpu_custom_call.1} parent=1 // loop_footer_branch
      %16 = sbr.rel target = $region3
    $region8: #{tpu_custom_call.1} parent=1 // loop_exit
      _
    %2074 = vsyncpa [#allocation4], 1
    %s2075 = scalar_lea.sflag [#allocation4], 1
    %2076 = vsyncpa %s2075, 1

</llo_original>
